<compile_context>
chip_gen: v7x
topology: tpu7x:2x2x1
jax: 0.10.0
libtpu: 0.0.40
codegen_flags: <defaults>
</compile_context>

<pallas_src>
import numpy as np
import jax
import jax.numpy as jnp
from jax.experimental import pallas as pl
from jax.experimental.pallas import tpu as pltpu


# ----------------------------------------------------------------------------
# Synthetic graph configuration (deterministic, in-script)
# ----------------------------------------------------------------------------
NA = 1                        # anchors per scale
NC = 2                        # classes
NO = NC + 5                   # outputs per anchor (7)
N_BATCH = 2
IMG_H = IMG_W = 16
CIN = 3

H2 = W2 = 4                   # final spatial grid (16 -> 8 -> 4 after two s2 convs)
CELL = 4                      # space-to-depth-by-4 cell grid is 4x4
CP = CELL + 2                 # zero-padded cell grid (6x6, one ring of conv autopad)
ROWS = N_BATCH * CP * CP      # 72 flattened padded cell rows
PAD = 8                       # shift headroom rows (>= max |tap shift| = 7, 8-aligned)
C_CELL0 = 4 * 4 * CIN         # 48 input channels per cell after s2d-by-4
C1 = 4 * 8                    # 32 = layer-0 output channels per cell (2x2 subpix x 8)
NOUT_PAD = 128                # lane-dense detect output width (valid lanes 0..6)

# Flat row shifts for the cell-space convs (row stride inside a batch block = CP).
K2_TAPS = (-CP - 1, -CP, -1, 0)                                       # (da,db) in {-1,0}^2
K3_TAPS = (-CP - 1, -CP, -CP + 1, -1, 0, 1, CP - 1, CP, CP + 1)       # (da,db) in {-1,0,1}^2


# ----------------------------------------------------------------------------
# Deterministic weights
# ----------------------------------------------------------------------------
def _make_weights(key):
    def conv_w(k_, ksz, cin, cout):
        kw, kb = jax.random.split(k_)
        w = jax.random.normal(kw, (ksz, ksz, cin, cout), jnp.float32)
        w = w * (1.0 / (ksz * ksz * cin) ** 0.5)
        b = 0.01 * jax.random.normal(kb, (cout,), jnp.float32)
        return w, b

    ks = jax.random.split(key, 5)
    return {
        "l0": conv_w(ks[0], 3, CIN, 8),          # Conv(3->8,   k3, s2)
        "l1": conv_w(ks[1], 3, 8, 16),           # Conv(8->16,  k3, s2)
        "l2": conv_w(ks[2], 3, 16, 16),          # Conv(16->16, k3, s1)
        "l4": conv_w(ks[3], 1, 32, 16),          # Conv(32->16, k1, s1) after Concat
        "det0": conv_w(ks[4], 1, 16, NA * NO),   # Detect 1x1 conv, scale 0
    }


# ----------------------------------------------------------------------------
# Pack weights into kernel-ready, cell-space layouts (once, outside the kernel)
# ----------------------------------------------------------------------------
def _pack_params(params):
    w0, b0 = params["l0"]; w1, b1 = params["l1"]; w2, b2 = params["l2"]
    w4, b4 = params["l4"]; wd, bd = params["det0"]
    w0, w1, w2, w4, wd = map(np.asarray, (w0, w1, w2, w4, wd))
    b0, b1, b2, b4, bd = map(np.asarray, (b0, b1, b2, b4, bd))

    # l0 (k3 s2 on pixels) rewritten as a k2 s1 conv over 4x4-pixel cells:
    # output cell (a,b), sub-pixel (p,q) reads input cell (a+da, b+db), slot (u,v)
    # with di = 4*da + u - 2*p + 1, dj = 4*db + v - 2*q + 1 (valid taps only).
    w0e = np.zeros((2, 2, 4, 4, CIN, 2, 2, 8), np.float32)
    for ia, da in enumerate((-1, 0)):
        for ib, db in enumerate((-1, 0)):
            for u in range(4):
                for v in range(4):
                    for p in range(2):
                        for q in range(2):
                            di = 4 * da + u - 2 * p + 1
                            dj = 4 * db + v - 2 * q + 1
                            if 0 <= di < 3 and 0 <= dj < 3:
                                w0e[ia, ib, u, v, :, p, q, :] = w0[di, dj]
    w0e = w0e.reshape(4 * C_CELL0, C1)                       # (192, 32)

    # l1 (k3 s2 on the 8x8 layer-0 grid) as a k2 s1 conv over its 2x2-pixel cells:
    # di = 2*da + p + 1, dj = 2*db + q + 1.
    w1e = np.zeros((2, 2, 2, 2, 8, 16), np.float32)
    for ia, da in enumerate((-1, 0)):
        for ib, db in enumerate((-1, 0)):
            for p in range(2):
                for q in range(2):
                    di = 2 * da + p + 1
                    dj = 2 * db + q + 1
                    if 0 <= di < 3 and 0 <= dj < 3:
                        w1e[ia, ib, p, q] = w1[di, dj]
    w1e = w1e.reshape(4 * C1, 16)                            # (128, 16)

    w2e = w2.reshape(9 * 16, 16)      # tap order (di,dj) row-major == K3_TAPS order
    w4e = w4.reshape(32, 16)          # rows [0:16] -> l2 output, [16:32] -> l1 output
    wde = np.zeros((16, NOUT_PAD), np.float32)
    wde[:, :NA * NO] = wd.reshape(16, NA * NO)
    bde = np.zeros((1, NOUT_PAD), np.float32)
    bde[0, :NA * NO] = bd

    mask = np.zeros((N_BATCH, CP, CP, 1), np.float32)        # 1 on non-pad-ring rows
    mask[:, 1:1 + CELL, 1:1 + CELL, :] = 1.0

    as_bf16 = lambda a: jnp.asarray(a, jnp.bfloat16)
    return {
        "w0": as_bf16(w0e), "w1": as_bf16(w1e), "w2": as_bf16(w2e),
        "w4": as_bf16(w4e), "wd": as_bf16(wde),
        "b0": jnp.asarray(np.tile(b0, 4)[None, :], jnp.float32),   # (1, 32)
        "b1": jnp.asarray(b1[None, :], jnp.float32),               # (1, 16)
        "b2": jnp.asarray(b2[None, :], jnp.float32),               # (1, 16)
        "b4": jnp.asarray(b4[None, :], jnp.float32),               # (1, 16)
        "bd": jnp.asarray(bde, jnp.float32),                       # (1, 128)
        "mask": jnp.asarray(mask.reshape(ROWS, 1)),                # (72, 1)
    }


# ----------------------------------------------------------------------------
# The fused Pallas kernel: entire graph, all activations VMEM/vreg-resident
# ----------------------------------------------------------------------------
def _yolo_fused_kernel(x0_ref, w0_ref, w1_ref, w2_ref, w4_ref, wd_ref,
                       b0_ref, b1_ref, b2_ref, b4_ref, bd_ref, mask_ref,
                       o_ref, buf1, buf2):
    f32, bf16 = jnp.float32, jnp.bfloat16
    silu = lambda v: v * jax.nn.sigmoid(v)
    valid = mask_ref[...] != 0.0                     # (ROWS, 1) non-pad-ring rows

    def gather_dot(src, taps, w_ref, b_ref):
        # In-VMEM im2col: each conv tap is a static row-shifted slice of the padded
        # activation; lane-concat the taps and do ONE bf16 MXU matmul (f32 accum).
        cols = jnp.concatenate(
            [src[PAD + d:PAD + d + ROWS, :] for d in taps], axis=1)
        return jnp.dot(cols.astype(bf16), w_ref[...],
                       preferred_element_type=f32) + b_ref[...]

    def stage(buf, act):
        # Park an activation (plus zeroed shift headroom) in VMEM for tap slicing.
        c = buf.shape[1]
        buf[0:PAD, :] = jnp.zeros((PAD, c), f32)
        buf[PAD + ROWS:PAD + ROWS + PAD, :] = jnp.zeros((PAD, c), f32)
        buf[PAD:PAD + ROWS, :] = act

    # l0: Conv(3->8, k3 s2) + SiLU, expressed as a k2 s1 conv over 4x4-pixel cells.
    x1 = jnp.where(valid, silu(gather_dot(x0_ref, K2_TAPS, w0_ref, b0_ref)), 0.0)
    stage(buf1, x1)                                                    # (72, 32)

    # l1: Conv(8->16, k3 s2) + SiLU, k2 s1 over cells of the layer-0 output.
    x2 = jnp.where(valid, silu(gather_dot(buf1, K2_TAPS, w1_ref, b1_ref)), 0.0)
    stage(buf2, x2)                                                    # (72, 16)

    # l2: Conv(16->16, k3 s1) + SiLU (ring rows only feed 1x1 convs -> no re-mask).
    x3 = silu(gather_dot(buf2, K3_TAPS, w2_ref, b2_ref))               # (72, 16)

    # l3 + l4: Concat([l2, l1]) + Conv(32->16, 1x1) + SiLU; the channel concat is
    # folded into two split matmuls against the two halves of w4.
    x4 = silu(jnp.dot(x3.astype(bf16), w4_ref[0:16, :], preferred_element_type=f32)
              + jnp.dot(x2.astype(bf16), w4_ref[16:32, :], preferred_element_type=f32)
              + b4_ref[...])

    # Detect, scale 0 (Model.forward returns x[0]): 1x1 conv, no activation.
    # Output lanes padded to 128 -> single lane-dense (unmasked) store.
    o_ref[...] = (jnp.dot(x4.astype(bf16), wd_ref[...], preferred_element_type=f32)
                  + bd_ref[...])


def _fused_forward(x_nchw, packed):
    """Whole graph in one pallas_call; only the Detect slab leaves VMEM."""
    n = x_nchw.shape[0]
    x = jnp.transpose(x_nchw, (0, 2, 3, 1))                    # NCHW -> NHWC
    # Space-to-depth by 4 (pure layout, no im2col duplication): cell (a,b) holds a
    # 4x4 pixel block, channel slot (u*4+v)*CIN + c.  One zero cell ring (conv
    # autopad) plus PAD rows of shift headroom; all tap gathers happen in-kernel.
    xc = x.reshape(n, CELL, IMG_H // CELL, CELL, IMG_W // CELL, CIN)
    xc = xc.transpose(0, 1, 3, 2, 4, 5).reshape(n, CELL, CELL, C_CELL0)
    xc = jnp.pad(xc, ((0, 0), (1, 1), (1, 1), (0, 0))).reshape(n * CP * CP, C_CELL0)
    xc = jnp.pad(xc, ((PAD, PAD), (0, 0)))                     # (88, 48) f32

    out = pl.pallas_call(
        _yolo_fused_kernel,
        out_shape=jax.ShapeDtypeStruct((ROWS, NOUT_PAD), jnp.float32),
        scratch_shapes=[pltpu.VMEM((ROWS + 2 * PAD, C1), jnp.float32),
                        pltpu.VMEM((ROWS + 2 * PAD, 16), jnp.float32)],
    )(xc, packed["w0"], packed["w1"], packed["w2"], packed["w4"], packed["wd"],
      packed["b0"], packed["b1"], packed["b2"], packed["b4"], packed["bd"],
      packed["mask"])

    y = out.reshape(n, CP, CP, NOUT_PAD)[:, 1:1 + H2, 1:1 + W2, :NA * NO]
    y = y.reshape(n, H2, W2, NA, NO)
    return jnp.transpose(y, (0, 3, 1, 2, 4))                   # (N, na, ny, nx, no)


yolo_forward = jax.jit(_fused_forward)


# ----------------------------------------------------------------------------
# Plain-JAX reference (mirrors Model.forward's routing loop) -- validation only
# ----------------------------------------------------------------------------
def _conv_ref(x, w, b, k, s, act=True):
    p = k // 2
    n, h, wdt, _ = x.shape
    ho = (h + 2 * p - k) // s + 1
    wo = (wdt + 2 * p - k) // s + 1
    xp = jnp.pad(x, ((0, 0), (p, p), (p, p), (0, 0)))
    out = jnp.zeros((n, ho, wo, w.shape[3]), jnp.float32) + b
    for di in range(k):
        for dj in range(k):
            patch = xp[:, di:di + s * ho:s, dj:dj + s * wo:s, :]
            out = out + jnp.einsum("nhwc,cd->nhwd", patch, w[di, dj],
                                   precision=jax.lax.Precision.HIGHEST)
    return out * jax.nn.sigmoid(out) if act else out


def _reference_forward(x_nchw, params):
    x = jnp.transpose(x_nchw, (0, 2, 3, 1))

    def l0(v): return _conv_ref(v, *params["l0"], 3, 2)
    def l1(v): return _conv_ref(v, *params["l1"], 3, 2)
    def l2(v): return _conv_ref(v, *params["l2"], 3, 1)
    def l3(vs): return jnp.concatenate(vs, axis=-1)
    def l4(v): return _conv_ref(v, *params["l4"], 1, 1)

    def detect(vs):
        d0 = _conv_ref(vs[0], *params["det0"], 1, 1, act=False)
        n, hh, ww, _ = d0.shape
        d0 = jnp.transpose(d0.reshape(n, hh, ww, NA, NO), (0, 3, 1, 2, 4))
        # TODO(synk): second detect scale omitted -- Model.forward returns x[0] only.
        return [d0]

    layers = [(0, -1, l0), (1, -1, l1), (2, -1, l2),
              (3, [-1, 1], l3), (4, -1, l4), (5, [-1, 0], detect)]
    save = {0, 1}
    y = []
    for i, f, m in layers:
        if f != -1:
            x = y[f] if isinstance(f, int) else [x if j == -1 else y[j] for j in f]
        x = m(x)
        y.append(x if i in save else None)
    return x[0]


if __name__ == "__main__":
    key = jax.random.PRNGKey(0)
    k_in, k_w = jax.random.split(key)
    x = jax.random.normal(k_in, (N_BATCH, CIN, IMG_H, IMG_W), jnp.float32)  # NCHW
    params = _make_weights(k_w)
    packed = _pack_params(params)

    out = yolo_forward(x, packed)
    out = jax.block_until_ready(out)
    assert out.shape == (N_BATCH, NA, H2, W2, NO), out.shape

    ref = _reference_forward(x, params)
    # bf16 MXU operands (f32 accumulation) vs an all-f32 reference -> ~1e-2-scale
    # rounding on O(1)-magnitude outputs; 5e-2 bounds it with margin.
    assert jnp.allclose(out, ref, atol=5e-2, rtol=5e-2), \
        float(jnp.max(jnp.abs(out - ref)))

    print("KERNEL_OK")
</pallas_src>

<mosaic_0001>
module attributes {stable_mosaic.version = 11 : i64} {
  func.func @_yolo_fused_kernel(%arg0: memref<88x48xf32, #tpu.memory_space<vmem>>, %arg1: memref<192x32xbf16, #tpu.memory_space<vmem>>, %arg2: memref<128x16xbf16, #tpu.memory_space<vmem>>, %arg3: memref<144x16xbf16, #tpu.memory_space<vmem>>, %arg4: memref<32x16xbf16, #tpu.memory_space<vmem>>, %arg5: memref<16x128xbf16, #tpu.memory_space<vmem>>, %arg6: memref<1x32xf32, #tpu.memory_space<vmem>>, %arg7: memref<1x16xf32, #tpu.memory_space<vmem>>, %arg8: memref<1x16xf32, #tpu.memory_space<vmem>>, %arg9: memref<1x16xf32, #tpu.memory_space<vmem>>, %arg10: memref<1x128xf32, #tpu.memory_space<vmem>>, %arg11: memref<72x1xf32, #tpu.memory_space<vmem>>, %arg12: memref<72x128xf32, #tpu.memory_space<vmem>>, %arg13: memref<88x32xf32, #tpu.memory_space<vmem>>, %arg14: memref<88x16xf32, #tpu.memory_space<vmem>>) attributes {dimension_semantics = [], scalar_prefetch = 0 : i64, scratch_operands = 2 : i64, tpu.core_type = #tpu.core_type<tc>} {
    %c0 = arith.constant 0 : index
    %c0_0 = arith.constant 0 : index
    %0 = vector.load %arg11[%c0, %c0_0] : memref<72x1xf32, #tpu.memory_space<vmem>>, vector<72x1xf32>
    %cst = arith.constant 0.000000e+00 : f32
    %1 = vector.broadcast %cst : f32 to vector<72x1xf32>
    %2 = arith.cmpf one, %0, %1 : vector<72x1xf32>
    %c1 = arith.constant 1 : index
    %c0_1 = arith.constant 0 : index
    %3 = vector.load %arg0[%c1, %c0_1] : memref<88x48xf32, #tpu.memory_space<vmem>>, vector<72x48xf32>
    %c2 = arith.constant 2 : index
    %c0_2 = arith.constant 0 : index
    %4 = vector.load %arg0[%c2, %c0_2] : memref<88x48xf32, #tpu.memory_space<vmem>>, vector<72x48xf32>
    %c7 = arith.constant 7 : index
    %c0_3 = arith.constant 0 : index
    %5 = vector.load %arg0[%c7, %c0_3] : memref<88x48xf32, #tpu.memory_space<vmem>>, vector<72x48xf32>
    %c8 = arith.constant 8 : index
    %c0_4 = arith.constant 0 : index
    %6 = vector.load %arg0[%c8, %c0_4] : memref<88x48xf32, #tpu.memory_space<vmem>>, vector<72x48xf32>
    %7 = tpu.concatenate %3, %4, %5, %6 in 1 : vector<72x48xf32>, vector<72x48xf32>, vector<72x48xf32>, vector<72x48xf32> -> vector<72x192xf32>
    %8 = arith.truncf %7 : vector<72x192xf32> to vector<72x192xbf16>
    %c0_5 = arith.constant 0 : index
    %c0_6 = arith.constant 0 : index
    %9 = vector.load %arg1[%c0_5, %c0_6] : memref<192x32xbf16, #tpu.memory_space<vmem>>, vector<192x32xbf16>
    %cst_7 = arith.constant dense<0.000000e+00> : vector<72x32xf32>
    %10 = tpu.matmul %8, %9, %cst_7 {dimension_numbers = #tpu.dot_dimension_numbers<[1], [0], [0], [1], [0, 0, 1, 1], [], []>} : vector<72x192xbf16>, vector<192x32xbf16>, vector<72x32xf32> -> vector<72x32xf32>
    %c0_8 = arith.constant 0 : index
    %c0_9 = arith.constant 0 : index
    %11 = vector.load %arg6[%c0_8, %c0_9] : memref<1x32xf32, #tpu.memory_space<vmem>>, vector<1x32xf32>
    %12 = vector.broadcast %11 : vector<1x32xf32> to vector<72x32xf32>
    %13 = arith.addf %10, %12 : vector<72x32xf32>
    %14 = arith.negf %13 : vector<72x32xf32>
    %15 = math.exp %14 : vector<72x32xf32>
    %cst_10 = arith.constant 1.000000e+00 : f32
    %16 = vector.broadcast %cst_10 : f32 to vector<72x32xf32>
    %17 = arith.addf %16, %15 : vector<72x32xf32>
    %18 = arith.divf %16, %17 : vector<72x32xf32>
    %19 = arith.mulf %13, %18 : vector<72x32xf32>
    %cst_11 = arith.constant 0.000000e+00 : f32
    %20 = vector.shape_cast %2 : vector<72x1xi1> to vector<72x1xi1>
    %21 = vector.broadcast %20 : vector<72x1xi1> to vector<72x32xi1>
    %22 = vector.broadcast %cst_11 : f32 to vector<72x32xf32>
    %23 = arith.select %21, %19, %22 : vector<72x32xi1>, vector<72x32xf32>
    %cst_12 = arith.constant 0.000000e+00 : f32
    %24 = vector.broadcast %cst_12 : f32 to vector<8x32xf32>
    %c0_13 = arith.constant 0 : index
    %c0_14 = arith.constant 0 : index
    %25 = vector.load %arg13[%c0_13, %c0_14] : memref<88x32xf32, #tpu.memory_space<vmem>>, vector<8x32xf32>
    tpu.vector_store %arg13[%c0_13, %c0_14], %24 {strides = array<i32>} : memref<88x32xf32, #tpu.memory_space<vmem>>, vector<8x32xf32>,
    %cst_15 = arith.constant 0.000000e+00 : f32
    %26 = vector.broadcast %cst_15 : f32 to vector<8x32xf32>
    %c80 = arith.constant 80 : index
    %c0_16 = arith.constant 0 : index
    %27 = vector.load %arg13[%c80, %c0_16] : memref<88x32xf32, #tpu.memory_space<vmem>>, vector<8x32xf32>
    tpu.vector_store %arg13[%c80, %c0_16], %26 {strides = array<i32>} : memref<88x32xf32, #tpu.memory_space<vmem>>, vector<8x32xf32>,
    %c8_17 = arith.constant 8 : index
    %c0_18 = arith.constant 0 : index
    %28 = vector.load %arg13[%c8_17, %c0_18] : memref<88x32xf32, #tpu.memory_space<vmem>>, vector<72x32xf32>
    tpu.vector_store %arg13[%c8_17, %c0_18], %23 {strides = array<i32>} : memref<88x32xf32, #tpu.memory_space<vmem>>, vector<72x32xf32>,
    %c1_19 = arith.constant 1 : index
    %c0_20 = arith.constant 0 : index
    %29 = vector.load %arg13[%c1_19, %c0_20] : memref<88x32xf32, #tpu.memory_space<vmem>>, vector<72x32xf32>
    %c2_21 = arith.constant 2 : index
    %c0_22 = arith.constant 0 : index
    %30 = vector.load %arg13[%c2_21, %c0_22] : memref<88x32xf32, #tpu.memory_space<vmem>>, vector<72x32xf32>
    %c7_23 = arith.constant 7 : index
    %c0_24 = arith.constant 0 : index
    %31 = vector.load %arg13[%c7_23, %c0_24] : memref<88x32xf32, #tpu.memory_space<vmem>>, vector<72x32xf32>
    %c8_25 = arith.constant 8 : index
    %c0_26 = arith.constant 0 : index
    %32 = vector.load %arg13[%c8_25, %c0_26] : memref<88x32xf32, #tpu.memory_space<vmem>>, vector<72x32xf32>
    %33 = tpu.concatenate %29, %30, %31, %32 in 1 : vector<72x32xf32>, vector<72x32xf32>, vector<72x32xf32>, vector<72x32xf32> -> vector<72x128xf32>
    %34 = arith.truncf %33 : vector<72x128xf32> to vector<72x128xbf16>
    %c0_27 = arith.constant 0 : index
    %c0_28 = arith.constant 0 : index
    %35 = vector.load %arg2[%c0_27, %c0_28] : memref<128x16xbf16, #tpu.memory_space<vmem>>, vector<128x16xbf16>
    %cst_29 = arith.constant dense<0.000000e+00> : vector<72x16xf32>
    %36 = tpu.matmul %34, %35, %cst_29 {dimension_numbers = #tpu.dot_dimension_numbers<[1], [0], [0], [1], [0, 0, 1, 1], [], []>} : vector<72x128xbf16>, vector<128x16xbf16>, vector<72x16xf32> -> vector<72x16xf32>
    %c0_30 = arith.constant 0 : index
    %c0_31 = arith.constant 0 : index
    %37 = vector.load %arg7[%c0_30, %c0_31] : memref<1x16xf32, #tpu.memory_space<vmem>>, vector<1x16xf32>
    %38 = vector.broadcast %37 : vector<1x16xf32> to vector<72x16xf32>
    %39 = arith.addf %36, %38 : vector<72x16xf32>
    %40 = arith.negf %39 : vector<72x16xf32>
    %41 = math.exp %40 : vector<72x16xf32>
    %cst_32 = arith.constant 1.000000e+00 : f32
    %42 = vector.broadcast %cst_32 : f32 to vector<72x16xf32>
    %43 = arith.addf %42, %41 : vector<72x16xf32>
    %44 = arith.divf %42, %43 : vector<72x16xf32>
    %45 = arith.mulf %39, %44 : vector<72x16xf32>
    %cst_33 = arith.constant 0.000000e+00 : f32
    %46 = vector.shape_cast %2 : vector<72x1xi1> to vector<72x1xi1>
    %47 = vector.broadcast %46 : vector<72x1xi1> to vector<72x16xi1>
    %48 = vector.broadcast %cst_33 : f32 to vector<72x16xf32>
    %49 = arith.select %47, %45, %48 : vector<72x16xi1>, vector<72x16xf32>
    %cst_34 = arith.constant 0.000000e+00 : f32
    %50 = vector.broadcast %cst_34 : f32 to vector<8x16xf32>
    %c0_35 = arith.constant 0 : index
    %c0_36 = arith.constant 0 : index
    %51 = vector.load %arg14[%c0_35, %c0_36] : memref<88x16xf32, #tpu.memory_space<vmem>>, vector<8x16xf32>
    tpu.vector_store %arg14[%c0_35, %c0_36], %50 {strides = array<i32>} : memref<88x16xf32, #tpu.memory_space<vmem>>, vector<8x16xf32>,
    %cst_37 = arith.constant 0.000000e+00 : f32
    %52 = vector.broadcast %cst_37 : f32 to vector<8x16xf32>
    %c80_38 = arith.constant 80 : index
    %c0_39 = arith.constant 0 : index
    %53 = vector.load %arg14[%c80_38, %c0_39] : memref<88x16xf32, #tpu.memory_space<vmem>>, vector<8x16xf32>
    tpu.vector_store %arg14[%c80_38, %c0_39], %52 {strides = array<i32>} : memref<88x16xf32, #tpu.memory_space<vmem>>, vector<8x16xf32>,
    %c8_40 = arith.constant 8 : index
    %c0_41 = arith.constant 0 : index
    %54 = vector.load %arg14[%c8_40, %c0_41] : memref<88x16xf32, #tpu.memory_space<vmem>>, vector<72x16xf32>
    tpu.vector_store %arg14[%c8_40, %c0_41], %49 {strides = array<i32>} : memref<88x16xf32, #tpu.memory_space<vmem>>, vector<72x16xf32>,
    %c1_42 = arith.constant 1 : index
    %c0_43 = arith.constant 0 : index
    %55 = vector.load %arg14[%c1_42, %c0_43] : memref<88x16xf32, #tpu.memory_space<vmem>>, vector<72x16xf32>
    %c2_44 = arith.constant 2 : index
    %c0_45 = arith.constant 0 : index
    %56 = vector.load %arg14[%c2_44, %c0_45] : memref<88x16xf32, #tpu.memory_space<vmem>>, vector<72x16xf32>
    %c3 = arith.constant 3 : index
    %c0_46 = arith.constant 0 : index
    %57 = vector.load %arg14[%c3, %c0_46] : memref<88x16xf32, #tpu.memory_space<vmem>>, vector<72x16xf32>
    %c7_47 = arith.constant 7 : index
    %c0_48 = arith.constant 0 : index
    %58 = vector.load %arg14[%c7_47, %c0_48] : memref<88x16xf32, #tpu.memory_space<vmem>>, vector<72x16xf32>
    %c8_49 = arith.constant 8 : index
    %c0_50 = arith.constant 0 : index
    %59 = vector.load %arg14[%c8_49, %c0_50] : memref<88x16xf32, #tpu.memory_space<vmem>>, vector<72x16xf32>
    %c9 = arith.constant 9 : index
    %c0_51 = arith.constant 0 : index
    %60 = vector.load %arg14[%c9, %c0_51] : memref<88x16xf32, #tpu.memory_space<vmem>>, vector<72x16xf32>
    %c13 = arith.constant 13 : index
    %c0_52 = arith.constant 0 : index
    %61 = vector.load %arg14[%c13, %c0_52] : memref<88x16xf32, #tpu.memory_space<vmem>>, vector<72x16xf32>
    %c14 = arith.constant 14 : index
    %c0_53 = arith.constant 0 : index
    %62 = vector.load %arg14[%c14, %c0_53] : memref<88x16xf32, #tpu.memory_space<vmem>>, vector<72x16xf32>
    %c15 = arith.constant 15 : index
    %c0_54 = arith.constant 0 : index
    %63 = vector.load %arg14[%c15, %c0_54] : memref<88x16xf32, #tpu.memory_space<vmem>>, vector<72x16xf32>
    %64 = tpu.concatenate %55, %56, %57, %58, %59, %60, %61, %62, %63 in 1 : vector<72x16xf32>, vector<72x16xf32>, vector<72x16xf32>, vector<72x16xf32>, vector<72x16xf32>, vector<72x16xf32>, vector<72x16xf32>, vector<72x16xf32>, vector<72x16xf32> -> vector<72x144xf32>
    %65 = arith.truncf %64 : vector<72x144xf32> to vector<72x144xbf16>
    %c0_55 = arith.constant 0 : index
    %c0_56 = arith.constant 0 : index
    %66 = vector.load %arg3[%c0_55, %c0_56] : memref<144x16xbf16, #tpu.memory_space<vmem>>, vector<144x16xbf16>
    %cst_57 = arith.constant dense<0.000000e+00> : vector<72x16xf32>
    %67 = tpu.matmul %65, %66, %cst_57 {dimension_numbers = #tpu.dot_dimension_numbers<[1], [0], [0], [1], [0, 0, 1, 1], [], []>} : vector<72x144xbf16>, vector<144x16xbf16>, vector<72x16xf32> -> vector<72x16xf32>
    %c0_58 = arith.constant 0 : index
    %c0_59 = arith.constant 0 : index
    %68 = vector.load %arg8[%c0_58, %c0_59] : memref<1x16xf32, #tpu.memory_space<vmem>>, vector<1x16xf32>
    %69 = vector.broadcast %68 : vector<1x16xf32> to vector<72x16xf32>
    %70 = arith.addf %67, %69 : vector<72x16xf32>
    %71 = arith.negf %70 : vector<72x16xf32>
    %72 = math.exp %71 : vector<72x16xf32>
    %cst_60 = arith.constant 1.000000e+00 : f32
    %73 = vector.broadcast %cst_60 : f32 to vector<72x16xf32>
    %74 = arith.addf %73, %72 : vector<72x16xf32>
    %75 = arith.divf %73, %74 : vector<72x16xf32>
    %76 = arith.mulf %70, %75 : vector<72x16xf32>
    %77 = arith.truncf %76 : vector<72x16xf32> to vector<72x16xbf16>
    %c0_61 = arith.constant 0 : index
    %c0_62 = arith.constant 0 : index
    %78 = vector.load %arg4[%c0_61, %c0_62] : memref<32x16xbf16, #tpu.memory_space<vmem>>, vector<16x16xbf16>
    %cst_63 = arith.constant dense<0.000000e+00> : vector<72x16xf32>
    %79 = tpu.matmul %77, %78, %cst_63 {dimension_numbers = #tpu.dot_dimension_numbers<[1], [0], [0], [1], [0, 0, 1, 1], [], []>} : vector<72x16xbf16>, vector<16x16xbf16>, vector<72x16xf32> -> vector<72x16xf32>
    %80 = arith.truncf %49 : vector<72x16xf32> to vector<72x16xbf16>
    %c16 = arith.constant 16 : index
    %c0_64 = arith.constant 0 : index
    %81 = vector.load %arg4[%c16, %c0_64] : memref<32x16xbf16, #tpu.memory_space<vmem>>, vector<16x16xbf16>
    %cst_65 = arith.constant dense<0.000000e+00> : vector<72x16xf32>
    %82 = tpu.matmul %80, %81, %cst_65 {dimension_numbers = #tpu.dot_dimension_numbers<[1], [0], [0], [1], [0, 0, 1, 1], [], []>} : vector<72x16xbf16>, vector<16x16xbf16>, vector<72x16xf32> -> vector<72x16xf32>
    %83 = arith.addf %79, %82 : vector<72x16xf32>
    %c0_66 = arith.constant 0 : index
    %c0_67 = arith.constant 0 : index
    %84 = vector.load %arg9[%c0_66, %c0_67] : memref<1x16xf32, #tpu.memory_space<vmem>>, vector<1x16xf32>
    %85 = vector.broadcast %84 : vector<1x16xf32> to vector<72x16xf32>
    %86 = arith.addf %83, %85 : vector<72x16xf32>
    %87 = arith.negf %86 : vector<72x16xf32>
    %88 = math.exp %87 : vector<72x16xf32>
    %cst_68 = arith.constant 1.000000e+00 : f32
    %89 = vector.broadcast %cst_68 : f32 to vector<72x16xf32>
    %90 = arith.addf %89, %88 : vector<72x16xf32>
    %91 = arith.divf %89, %90 : vector<72x16xf32>
    %92 = arith.mulf %86, %91 : vector<72x16xf32>
    %93 = arith.truncf %92 : vector<72x16xf32> to vector<72x16xbf16>
    %c0_69 = arith.constant 0 : index
    %c0_70 = arith.constant 0 : index
    %94 = vector.load %arg5[%c0_69, %c0_70] : memref<16x128xbf16, #tpu.memory_space<vmem>>, vector<16x128xbf16>
    %cst_71 = arith.constant dense<0.000000e+00> : vector<72x128xf32>
    %95 = tpu.matmul %93, %94, %cst_71 {dimension_numbers = #tpu.dot_dimension_numbers<[1], [0], [0], [1], [0, 0, 1, 1], [], []>} : vector<72x16xbf16>, vector<16x128xbf16>, vector<72x128xf32> -> vector<72x128xf32>
    %c0_72 = arith.constant 0 : index
    %c0_73 = arith.constant 0 : index
    %96 = vector.load %arg10[%c0_72, %c0_73] : memref<1x128xf32, #tpu.memory_space<vmem>>, vector<1x128xf32>
    %97 = vector.broadcast %96 : vector<1x128xf32> to vector<72x128xf32>
    %98 = arith.addf %95, %97 : vector<72x128xf32>
    %c0_74 = arith.constant 0 : index
    %c0_75 = arith.constant 0 : index
    %99 = vector.load %arg12[%c0_74, %c0_75] : memref<72x128xf32, #tpu.memory_space<vmem>>, vector<72x128xf32>
    tpu.vector_store %arg12[%c0_74, %c0_75], %98 {strides = array<i32>} : memref<72x128xf32, #tpu.memory_space<vmem>>, vector<72x128xf32>,
    return
  }
}

</mosaic_0001>

<llo_original>
// kernel: _fused_forward.1
$region0: #{_fused_forward.1}
  #allocation0 [shape = 'u32[]', space=smem, size = 0x4, offset = 0x4, fixed_abs, tag = 'smem constant byte address 0x4 - core index']
  #allocation1 [shape = 'u32[144,128]{1,0:T(1,128)}', space=vmem, size = 0x12000, scoped, tag = 'internal scratch']
  #allocation2 [shape = 'f32[88,32]{1,0:T(8,128)}', space=vmem, size = 0xb000, scoped, tag = 'scratch operand']
  #allocation3 [shape = 'f32[88,16]{1,0:T(8,128)}', space=vmem, size = 0xb000, scoped, tag = 'scratch operand']
  %s0 = inlined_call_operand.vmem [shape: f32[88,48], index: 0, kind: input, shape index: {}]
  %s1 = inlined_call_operand.vmem [shape: bf16[192,32], index: 1, kind: input, shape index: {}]
  %s2 = inlined_call_operand.vmem [shape: bf16[128,16], index: 2, kind: input, shape index: {}]
  %s3 = inlined_call_operand.vmem [shape: bf16[144,16], index: 3, kind: input, shape index: {}]
  %s4 = inlined_call_operand.vmem [shape: bf16[32,16], index: 4, kind: input, shape index: {}]
  %s5 = inlined_call_operand.vmem [shape: bf16[16,128], index: 5, kind: input, shape index: {}]
  %s6 = inlined_call_operand.vmem [shape: f32[1,32], index: 6, kind: input, shape index: {}]
  %s7 = inlined_call_operand.vmem [shape: f32[1,16], index: 7, kind: input, shape index: {}]
  %s8 = inlined_call_operand.vmem [shape: f32[1,16], index: 8, kind: input, shape index: {}]
  %s9 = inlined_call_operand.vmem [shape: f32[1,16], index: 9, kind: input, shape index: {}]
  %s10 = inlined_call_operand.vmem [shape: f32[1,128], index: 10, kind: input, shape index: {}]
  %s11 = inlined_call_operand.vmem [shape: f32[72,1], index: 11, kind: input, shape index: {}]
  %s12 = inlined_call_operand.vmem [shape: f32[72,128], index: 12, kind: output, shape index: {}]
  %s13 = sld [smem:[#allocation0]]
  $region58: #{_fused_forward.1} parent=0
    _
  %s15 = ssub.s32 1, %s13
  %s16 = scalar_select 0, %s15, %s13
  // Predicated region
  $region2: #{_fused_forward.1} parent=0 // pred_check
    _
  $region3: #{_fused_forward.1} parent=0 // pred_check_branch
    %18 = sbr.rel (0) target = $region5
  $region4: #{_fused_forward.1} parent=0 // pred_region
    _
  $region5: #{_fused_forward.1} parent=0 // pred_fallthru
    _
  // Predicated region
  $region6: #{_fused_forward.1} parent=0 // pred_check
    _
  $region7: #{_fused_forward.1} parent=0 // pred_check_branch
    %20 = sbr.rel (0) target = $region9
  $region8: #{_fused_forward.1} parent=0 // pred_region
    _
  $region9: #{_fused_forward.1} parent=0 // pred_fallthru
    _
  // Predicated region
  $region10: #{_fused_forward.1} parent=0 // pred_check
    _
  $region11: #{_fused_forward.1} parent=0 // pred_check_branch
    %22 = sbr.rel (0) target = $region13
  $region12: #{_fused_forward.1} parent=0 // pred_region
    _
  $region13: #{_fused_forward.1} parent=0 // pred_fallthru
    _
  // Predicated region
  $region14: #{_fused_forward.1} parent=0 // pred_check
    _
  $region15: #{_fused_forward.1} parent=0 // pred_check_branch
    %24 = sbr.rel (0) target = $region17
  $region16: #{_fused_forward.1} parent=0 // pred_region
    _
  $region17: #{_fused_forward.1} parent=0 // pred_fallthru
    _
  // Predicated region
  $region18: #{_fused_forward.1} parent=0 // pred_check
    _
  $region19: #{_fused_forward.1} parent=0 // pred_check_branch
    %26 = sbr.rel (0) target = $region21
  $region20: #{_fused_forward.1} parent=0 // pred_region
    _
  $region21: #{_fused_forward.1} parent=0 // pred_fallthru
    _
  // Predicated region
  $region22: #{_fused_forward.1} parent=0 // pred_check
    _
  $region23: #{_fused_forward.1} parent=0 // pred_check_branch
    %28 = sbr.rel (0) target = $region25
  $region24: #{_fused_forward.1} parent=0 // pred_region
    _
  $region25: #{_fused_forward.1} parent=0 // pred_fallthru
    _
  // Predicated region
  $region26: #{_fused_forward.1} parent=0 // pred_check
    _
  $region27: #{_fused_forward.1} parent=0 // pred_check_branch
    %30 = sbr.rel (0) target = $region29
  $region28: #{_fused_forward.1} parent=0 // pred_region
    _
  $region29: #{_fused_forward.1} parent=0 // pred_fallthru
    _
  // Predicated region
  $region30: #{_fused_forward.1} parent=0 // pred_check
    _
  $region31: #{_fused_forward.1} parent=0 // pred_check_branch
    %32 = sbr.rel (0) target = $region33
  $region32: #{_fused_forward.1} parent=0 // pred_region
    _
  $region33: #{_fused_forward.1} parent=0 // pred_fallthru
    _
  // Predicated region
  $region34: #{_fused_forward.1} parent=0 // pred_check
    _
  $region35: #{_fused_forward.1} parent=0 // pred_check_branch
    %34 = sbr.rel (0) target = $region37
  $region36: #{_fused_forward.1} parent=0 // pred_region
    _
  $region37: #{_fused_forward.1} parent=0 // pred_fallthru
    _
  // Predicated region
  $region38: #{_fused_forward.1} parent=0 // pred_check
    _
  $region39: #{_fused_forward.1} parent=0 // pred_check_branch
    %36 = sbr.rel (0) target = $region41
  $region40: #{_fused_forward.1} parent=0 // pred_region
    _
  $region41: #{_fused_forward.1} parent=0 // pred_fallthru
    _
  // Predicated region
  $region42: #{_fused_forward.1} parent=0 // pred_check
    _
  $region43: #{_fused_forward.1} parent=0 // pred_check_branch
    %38 = sbr.rel (0) target = $region45
  $region44: #{_fused_forward.1} parent=0 // pred_region
    _
  $region45: #{_fused_forward.1} parent=0 // pred_fallthru
    _
  // Predicated region
  $region46: #{_fused_forward.1} parent=0 // pred_check
    _
  $region47: #{_fused_forward.1} parent=0 // pred_check_branch
    %40 = sbr.rel (0) target = $region49
  $region48: #{_fused_forward.1} parent=0 // pred_region
    _
  $region49: #{_fused_forward.1} parent=0 // pred_fallthru
    _
  %v42 = vld [vmem:[%s11] sm:$0xff]
  %v43 = vld [vmem:[%s11 + $0x8] sm:$0xff]
  %v44 = vld [vmem:[%s11 + $0x10] sm:$0xff]
  %v45 = vld [vmem:[%s11 + $0x18] sm:$0xff]
  %v46 = vld [vmem:[%s11 + $0x20] sm:$0xff]
  %v47 = vld [vmem:[%s11 + $0x28] sm:$0xff]
  %v48 = vld [vmem:[%s11 + $0x30] sm:$0xff]
  %v49 = vld [vmem:[%s11 + $0x38] sm:$0xff]
  %v50 = vld [vmem:[%s11 + $0x40] sm:$0xff]
  %vm51 = vcmp.ne.f32.partialorder %v42, 0.0
  %vm52 = vcmp.ne.f32.partialorder %v43, 0.0
  %vm53 = vcmp.ne.f32.partialorder %v44, 0.0
  %vm54 = vcmp.ne.f32.partialorder %v45, 0.0
  %vm55 = vcmp.ne.f32.partialorder %v46, 0.0
  %vm56 = vcmp.ne.f32.partialorder %v47, 0.0
  %vm57 = vcmp.ne.f32.partialorder %v48, 0.0
  %vm58 = vcmp.ne.f32.partialorder %v49, 0.0
  %vm59 = vcmp.ne.f32.partialorder %v50, 0.0
  %v60 = vld [vmem:[%s0 + $0x1] sm:$0xff]
  %v61 = vld [vmem:[%s0 + $0x9] sm:$0xff]
  %v62 = vld [vmem:[%s0 + $0x11] sm:$0xff]
  %v63 = vld [vmem:[%s0 + $0x19] sm:$0xff]
  %v64 = vld [vmem:[%s0 + $0x21] sm:$0xff]
  %v65 = vld [vmem:[%s0 + $0x29] sm:$0xff]
  %v66 = vld [vmem:[%s0 + $0x31] sm:$0xff]
  %v67 = vld [vmem:[%s0 + $0x39] sm:$0xff]
  %v68 = vld [vmem:[%s0 + $0x41] sm:$0xff]
  %v69 = vld [vmem:[%s0 + $0x2] sm:$0xff]
  %v70 = vld [vmem:[%s0 + $0xa] sm:$0xff]
  %v71 = vld [vmem:[%s0 + $0x12] sm:$0xff]
  %v72 = vld [vmem:[%s0 + $0x1a] sm:$0xff]
  %v73 = vld [vmem:[%s0 + $0x22] sm:$0xff]
  %v74 = vld [vmem:[%s0 + $0x2a] sm:$0xff]
  %v75 = vld [vmem:[%s0 + $0x32] sm:$0xff]
  %v76 = vld [vmem:[%s0 + $0x3a] sm:$0xff]
  %v77 = vld [vmem:[%s0 + $0x42] sm:$0xff]
  %v78 = vld [vmem:[%s0 + $0x7] sm:$0xff]
  %v79 = vld [vmem:[%s0 + $0xf] sm:$0xff]
  %v80 = vld [vmem:[%s0 + $0x17] sm:$0xff]
  %v81 = vld [vmem:[%s0 + $0x1f] sm:$0xff]
  %v82 = vld [vmem:[%s0 + $0x27] sm:$0xff]
  %v83 = vld [vmem:[%s0 + $0x2f] sm:$0xff]
  %v84 = vld [vmem:[%s0 + $0x37] sm:$0xff]
  %v85 = vld [vmem:[%s0 + $0x3f] sm:$0xff]
  %v86 = vld [vmem:[%s0 + $0x47] sm:$0xff]
  %v87 = vld [vmem:[%s0 + $0x8] sm:$0xff]
  %v88 = vld [vmem:[%s0 + $0x10] sm:$0xff]
  %v89 = vld [vmem:[%s0 + $0x18] sm:$0xff]
  %v90 = vld [vmem:[%s0 + $0x20] sm:$0xff]
  %v91 = vld [vmem:[%s0 + $0x28] sm:$0xff]
  %v92 = vld [vmem:[%s0 + $0x30] sm:$0xff]
  %v93 = vld [vmem:[%s0 + $0x38] sm:$0xff]
  %v94 = vld [vmem:[%s0 + $0x40] sm:$0xff]
  %v95 = vld [vmem:[%s0 + $0x48] sm:$0xff]
  %105 = vrot.lane.b32.xlu0 %v69, 48
  %v106 = vpop.permute.xlu0 %105
  %107 = vrot.lane.b32.xlu0 %v70, 48
  %v108 = vpop.permute.xlu0 %107
  %109 = vrot.lane.b32.xlu0 %v71, 48
  %v110 = vpop.permute.xlu0 %109
  %111 = vrot.lane.b32.xlu0 %v72, 48
  %v112 = vpop.permute.xlu0 %111
  %113 = vrot.lane.b32.xlu0 %v73, 48
  %v114 = vpop.permute.xlu0 %113
  %115 = vrot.lane.b32.xlu0 %v74, 48
  %v116 = vpop.permute.xlu0 %115
  %117 = vrot.lane.b32.xlu0 %v75, 48
  %v118 = vpop.permute.xlu0 %117
  %119 = vrot.lane.b32.xlu0 %v76, 48
  %v120 = vpop.permute.xlu0 %119
  %121 = vrot.lane.b32.xlu0 %v77, 48
  %v122 = vpop.permute.xlu0 %121
  %141 = vrot.lane.b32.xlu0 %v78, 96
  %v142 = vpop.permute.xlu0 %141
  %143 = vrot.lane.b32.xlu0 %v79, 96
  %v144 = vpop.permute.xlu0 %143
  %145 = vrot.lane.b32.xlu0 %v80, 96
  %v146 = vpop.permute.xlu0 %145
  %147 = vrot.lane.b32.xlu0 %v81, 96
  %v148 = vpop.permute.xlu0 %147
  %149 = vrot.lane.b32.xlu0 %v82, 96
  %v150 = vpop.permute.xlu0 %149
  %151 = vrot.lane.b32.xlu0 %v83, 96
  %v152 = vpop.permute.xlu0 %151
  %153 = vrot.lane.b32.xlu0 %v84, 96
  %v154 = vpop.permute.xlu0 %153
  %155 = vrot.lane.b32.xlu0 %v85, 96
  %v156 = vpop.permute.xlu0 %155
  %157 = vrot.lane.b32.xlu0 %v86, 96
  %v158 = vpop.permute.xlu0 %157
  %177 = vrot.lane.b32.xlu0 %v87, 16
  %v178 = vpop.permute.xlu0 %177
  %179 = vrot.lane.b32.xlu0 %v88, 16
  %v180 = vpop.permute.xlu0 %179
  %181 = vrot.lane.b32.xlu0 %v89, 16
  %v182 = vpop.permute.xlu0 %181
  %183 = vrot.lane.b32.xlu0 %v90, 16
  %v184 = vpop.permute.xlu0 %183
  %185 = vrot.lane.b32.xlu0 %v91, 16
  %v186 = vpop.permute.xlu0 %185
  %187 = vrot.lane.b32.xlu0 %v92, 16
  %v188 = vpop.permute.xlu0 %187
  %189 = vrot.lane.b32.xlu0 %v93, 16
  %v190 = vpop.permute.xlu0 %189
  %191 = vrot.lane.b32.xlu0 %v94, 16
  %v192 = vpop.permute.xlu0 %191
  %193 = vrot.lane.b32.xlu0 %v95, 16
  %v194 = vpop.permute.xlu0 %193
  %vm204 = vcmask 392192
  %v205 = vsel %vm204, %v60, %v106
  %v206 = vsel %vm204, %v61, %v108
  %v207 = vsel %vm204, %v62, %v110
  %v208 = vsel %vm204, %v63, %v112
  %v209 = vsel %vm204, %v64, %v114
  %v210 = vsel %vm204, %v65, %v116
  %v211 = vsel %vm204, %v66, %v118
  %v212 = vsel %vm204, %v67, %v120
  %v213 = vsel %vm204, %v68, %v122
  %vm214 = vcmask 785408
  %v215 = vsel %vm214, %v205, %v142
  %v216 = vsel %vm214, %v206, %v144
  %v217 = vsel %vm214, %v207, %v146
  %v218 = vsel %vm214, %v208, %v148
  %v219 = vsel %vm214, %v209, %v150
  %v220 = vsel %vm214, %v210, %v152
  %v221 = vsel %vm214, %v211, %v154
  %v222 = vsel %vm214, %v212, %v156
  %v223 = vsel %vm214, %v213, %v158
  %vm224 = vcmask 130048
  %v225 = vsel %vm224, %v142, %v178
  %v226 = vsel %vm224, %v144, %v180
  %v227 = vsel %vm224, %v146, %v182
  %v228 = vsel %vm224, %v148, %v184
  %v229 = vsel %vm224, %v150, %v186
  %v230 = vsel %vm224, %v152, %v188
  %v231 = vsel %vm224, %v154, %v190
  %v232 = vsel %vm224, %v156, %v192
  %v233 = vsel %vm224, %v158, %v194
  %v234 = vpack.c.bf16 %v216, %v215
  %v235 = vpack.c.bf16 %v226, %v225
  %v236 = vpack.c.bf16 %v218, %v217
  %v237 = vpack.c.bf16 %v228, %v227
  %v238 = vpack.c.bf16 %v220, %v219
  %v239 = vpack.c.bf16 %v230, %v229
  %v240 = vpack.c.bf16 %v222, %v221
  %v241 = vpack.c.bf16 %v232, %v231
  %v242 = vpack.c.bf16 %v223, %v223
  %v243 = vpack.c.bf16 %v233, %v233
  %v244 = vld [vmem:[%s1] sm:$0xf]
  %v245 = vld [vmem:[%s1 + $0x4] sm:$0xf]
  %v246 = vld [vmem:[%s1 + $0x8] sm:$0xf]
  %v247 = vld [vmem:[%s1 + $0xc] sm:$0xf]
  %v248 = vld [vmem:[%s1 + $0x10] sm:$0xf]
  %v249 = vld [vmem:[%s1 + $0x14] sm:$0xf]
  %v250 = vld [vmem:[%s1 + $0x18] sm:$0xf]
  %v251 = vld [vmem:[%s1 + $0x1c] sm:$0xf]
  %v252 = vld [vmem:[%s1 + $0x20] sm:$0xf]
  %v253 = vld [vmem:[%s1 + $0x24] sm:$0xf]
  %v254 = vld [vmem:[%s1 + $0x28] sm:$0xf]
  %v255 = vld [vmem:[%s1 + $0x2c] sm:$0xf]
  %v256 = vld [vmem:[%s1 + $0x30] sm:$0xf]
  %v257 = vld [vmem:[%s1 + $0x34] sm:$0xf]
  %v258 = vld [vmem:[%s1 + $0x38] sm:$0xf]
  %v259 = vld [vmem:[%s1 + $0x3c] sm:$0xf]
  %v260 = vld [vmem:[%s1 + $0x40] sm:$0xf]
  %v261 = vld [vmem:[%s1 + $0x44] sm:$0xf]
  %v262 = vld [vmem:[%s1 + $0x48] sm:$0xf]
  %v263 = vld [vmem:[%s1 + $0x4c] sm:$0xf]
  %v264 = vld [vmem:[%s1 + $0x50] sm:$0xf]
  %v265 = vld [vmem:[%s1 + $0x54] sm:$0xf]
  %v266 = vld [vmem:[%s1 + $0x58] sm:$0xf]
  %v267 = vld [vmem:[%s1 + $0x5c] sm:$0xf]
  %v268 = vld [vmem:[%s6] sm:$0x1]
  %v270 = vlaneseq
  %v271 = vshrl.u32 %v270, 7
  %v272 = vsub.s32 0, %v271
  %v273 = vrot.slane %v268, %v272
  %v299 = vunpack.c.l.b16 %v244
  %v300 = vunpack.c.l.b16 %v245
  %v301 = vunpack.c.l.b16 %v246
  %v302 = vunpack.c.l.b16 %v247
  %v303 = vunpack.c.l.b16 %v248
  %v304 = vunpack.c.l.b16 %v249
  %v305 = vunpack.c.l.b16 %v250
  %v306 = vunpack.c.l.b16 %v251
  %v307 = vunpack.c.l.b16 %v252
  %v308 = vunpack.c.l.b16 %v253
  %v309 = vunpack.c.l.b16 %v254
  %v310 = vunpack.c.l.b16 %v255
  %v311 = vunpack.c.l.b16 %v256
  %v312 = vunpack.c.l.b16 %v257
  %v313 = vunpack.c.l.b16 %v258
  %v314 = vunpack.c.l.b16 %v259
  %v315 = vunpack.c.l.b16 %v260
  %v316 = vunpack.c.l.b16 %v261
  %v317 = vunpack.c.l.b16 %v262
  %v318 = vunpack.c.l.b16 %v263
  %v319 = vunpack.c.l.b16 %v264
  %v320 = vunpack.c.l.b16 %v265
  %v321 = vunpack.c.l.b16 %v266
  %v322 = vunpack.c.l.b16 %v267
  %v323 = vpack.c.b16 %v300, %v299
  %v324 = vpack.c.b16 %v302, %v301
  %v325 = vpack.c.b16 %v304, %v303
  %v326 = vpack.c.b16 %v306, %v305
  %v327 = vpack.c.b16 %v308, %v307
  %v328 = vpack.c.b16 %v310, %v309
  %v329 = vpack.c.b16 %v312, %v311
  %v330 = vpack.c.b16 %v314, %v313
  %v331 = vpack.c.b16 %v316, %v315
  %v332 = vpack.c.b16 %v318, %v317
  %v333 = vpack.c.b16 %v320, %v319
  %v334 = vpack.c.b16 %v322, %v321
  %vm347 = vcmask 523264
  %v349 = vsel %vm347, %v235, 0
  %v352 = vsel %vm347, %v237, 0
  %v355 = vsel %vm347, %v239, 0
  %v358 = vsel %vm347, %v241, 0
  %v361 = vsel %vm347, %v243, 0
  %363 = vmatprep.subr.bf16.mxu0 0
  %364 = vmatpush1.bf16.msra.mxu0 %v323
  %365 = vmatprep.subr.bf16.mxu0 0
  %366 = vmatpush1.bf16.msra.mxu0 %v324
  %367 = vmatprep.subr.bf16.mxu0 0
  %368 = vmatpush1.bf16.msra.mxu0 %v325
  %369 = vmatprep.subr.bf16.mxu0 0
  %370 = vmatpush1.bf16.msra.mxu0 %v326
  %371 = vmatprep.subr.bf16.mxu0 0
  %372 = vmatpush1.bf16.msra.mxu0 %v327
  %373 = vmatprep.subr.bf16.mxu0 0
  %374 = vmatpush1.bf16.msra.mxu0 %v328
  %375 = vmatprep.subr.bf16.mxu0 0
  %376 = vmatpush1.bf16.msra.mxu0 %v329
  %377 = vmatprep.subr.bf16.mxu0 0
  %378 = vmatpush1.bf16.msra.mxu0 %v330
  %379 = vmatprep.subr.bf16.mxu0 0
  %380 = vmatpush1.bf16.msra.mxu0 %v331
  %381 = vmatprep.subr.bf16.mxu0 0
  %382 = vmatpush1.bf16.msra.mxu0 %v332
  %383 = vmatprep.subr.bf16.mxu0 0
  %384 = vmatpush1.bf16.msra.mxu0 %v333
  %385 = vmatprep.subr.bf16.mxu0 0
  %386 = vmatpush1.bf16.msra.mxu0 %v334
  %387 = vmatprep.subr.bf16.mxu0 0
  %388 = vmatpush1.bf16.msra.mxu0 0
  %389 = vmatprep.subr.bf16.mxu0 0
  %390 = vmatpush1.bf16.msra.mxu0 0
  %391 = vmatprep.subr.bf16.mxu0 0
  %392 = vmatpush1.bf16.msra.mxu0 0
  %393 = vmatprep.subr.bf16.mxu0 0
  %394 = vmatpush1.bf16.msra.mxu0 0
  %395 = vmatprep.mubr.bf16.mxu0 %v349
  %396 = vmatmul.mubr.bf16.gmra.mrb[0].mxu0 %v234
  %v397 = vpop.f32.mrb[0].mxu0
  %v398 = vadd.f32 %v273, %v397
  %v399 = vpop.f32.mrb[0].mxu0
  %v400 = vpop.f32.mrb[0].mxu0
  %v401 = vadd.f32 %v273, %v400
  %v402 = vpop.f32.mrb[0].mxu0
  %403 = vmatprep.mubr.bf16.mxu0 %v352
  %404 = vmatmul.mubr.bf16.gmra.mrb[0].mxu0 %v236
  %v405 = vpop.f32.mrb[0].mxu0
  %v406 = vadd.f32 %v273, %v405
  %v407 = vpop.f32.mrb[0].mxu0
  %v408 = vpop.f32.mrb[0].mxu0
  %v409 = vadd.f32 %v273, %v408
  %v410 = vpop.f32.mrb[0].mxu0
  %411 = vmatprep.mubr.bf16.mxu0 %v355
  %412 = vmatmul.mubr.bf16.gmra.mrb[0].mxu0 %v238
  %v413 = vpop.f32.mrb[0].mxu0
  %v414 = vadd.f32 %v273, %v413
  %v415 = vpop.f32.mrb[0].mxu0
  %v416 = vpop.f32.mrb[0].mxu0
  %v417 = vadd.f32 %v273, %v416
  %v418 = vpop.f32.mrb[0].mxu0
  %419 = vmatprep.mubr.bf16.mxu0 %v358
  %420 = vmatmul.mubr.bf16.gmra.mrb[0].mxu0 %v240
  %v421 = vpop.f32.mrb[0].mxu0
  %v422 = vadd.f32 %v273, %v421
  %v423 = vpop.f32.mrb[0].mxu0
  %v424 = vpop.f32.mrb[0].mxu0
  %v425 = vadd.f32 %v273, %v424
  %v426 = vpop.f32.mrb[0].mxu0
  %427 = vmatprep.mubr.bf16.mxu0 %v361
  %428 = vmatmul.mubr.bf16.gmra.mrb[0].mxu0 %v242
  %v429 = vpop.f32.mrb[0].mxu0
  %v430 = vadd.f32 %v273, %v429
  %v431 = vpop.f32.mrb[0].mxu0
  %v432 = vpop.f32.mrb[0].mxu0
  %v433 = vpop.f32.mrb[0].mxu0
  %434 = vdwg.mxu0
  %v435 = vxor.u32 %v398, 2147483648
  %v436 = vxor.u32 %v401, 2147483648
  %v437 = vxor.u32 %v406, 2147483648
  %v438 = vxor.u32 %v409, 2147483648
  %v439 = vxor.u32 %v414, 2147483648
  %v440 = vxor.u32 %v417, 2147483648
  %v441 = vxor.u32 %v422, 2147483648
  %v442 = vxor.u32 %v425, 2147483648
  %v443 = vxor.u32 %v430, 2147483648
  %v444 = vmul.f32 %v435, 1.442695
  %v445 = vpow.pop %v444
  %v446 = vmul.f32 %v436, 1.442695
  %v447 = vpow.pop %v446
  %v448 = vmul.f32 %v437, 1.442695
  %v449 = vpow.pop %v448
  %v450 = vmul.f32 %v438, 1.442695
  %v451 = vpow.pop %v450
  %v452 = vmul.f32 %v439, 1.442695
  %v453 = vpow.pop %v452
  %v454 = vmul.f32 %v440, 1.442695
  %v455 = vpow.pop %v454
  %v456 = vmul.f32 %v441, 1.442695
  %v457 = vpow.pop %v456
  %v458 = vmul.f32 %v442, 1.442695
  %v459 = vpow.pop %v458
  %v460 = vmul.f32 %v443, 1.442695
  %v461 = vpow.pop %v460
  %v462 = vadd.f32 %v445, 1.0
  %v463 = vadd.f32 %v447, 1.0
  %v464 = vadd.f32 %v449, 1.0
  %v465 = vadd.f32 %v451, 1.0
  %v466 = vadd.f32 %v453, 1.0
  %v467 = vadd.f32 %v455, 1.0
  %v468 = vadd.f32 %v457, 1.0
  %v469 = vadd.f32 %v459, 1.0
  %v470 = vadd.f32 %v461, 1.0
  %v471 = vrcp.pop %v462
  %v472 = vmul.f32 1.0, %v471
  %v473 = vrcp.pop %v463
  %v474 = vmul.f32 1.0, %v473
  %v475 = vrcp.pop %v464
  %v476 = vmul.f32 1.0, %v475
  %v477 = vrcp.pop %v465
  %v478 = vmul.f32 1.0, %v477
  %v479 = vrcp.pop %v466
  %v480 = vmul.f32 1.0, %v479
  %v481 = vrcp.pop %v467
  %v482 = vmul.f32 1.0, %v481
  %v483 = vrcp.pop %v468
  %v484 = vmul.f32 1.0, %v483
  %v485 = vrcp.pop %v469
  %v486 = vmul.f32 1.0, %v485
  %v487 = vrcp.pop %v470
  %v488 = vmul.f32 1.0, %v487
  %v489 = vmul.f32 %v398, %v472
  %v490 = vmul.f32 %v401, %v474
  %v491 = vmul.f32 %v406, %v476
  %v492 = vmul.f32 %v409, %v478
  %v493 = vmul.f32 %v414, %v480
  %v494 = vmul.f32 %v417, %v482
  %v495 = vmul.f32 %v422, %v484
  %v496 = vmul.f32 %v425, %v486
  %v497 = vmul.f32 %v430, %v488
  %v498 = vsel %vm51, 1, 0
  %v499 = vsel %vm52, 1, 0
  %v500 = vsel %vm53, 1, 0
  %v501 = vsel %vm54, 1, 0
  %v502 = vsel %vm55, 1, 0
  %v503 = vsel %vm56, 1, 0
  %v504 = vsel %vm57, 1, 0
  %v505 = vsel %vm58, 1, 0
  %v506 = vsel %vm59, 1, 0
  %507 = vset.pattern.permute.xlu0 0
  %508 = vperm.xlu0 %507, %v498
  %v509 = vpop.permute.xlu0 %508
  %510 = vset.pattern.permute.xlu0 0
  %511 = vperm.xlu0 %510, %v499
  %v512 = vpop.permute.xlu0 %511
  %513 = vset.pattern.permute.xlu0 0
  %514 = vperm.xlu0 %513, %v500
  %v515 = vpop.permute.xlu0 %514
  %516 = vset.pattern.permute.xlu0 0
  %517 = vperm.xlu0 %516, %v501
  %v518 = vpop.permute.xlu0 %517
  %519 = vset.pattern.permute.xlu0 0
  %520 = vperm.xlu0 %519, %v502
  %v521 = vpop.permute.xlu0 %520
  %522 = vset.pattern.permute.xlu0 0
  %523 = vperm.xlu0 %522, %v503
  %v524 = vpop.permute.xlu0 %523
  %525 = vset.pattern.permute.xlu0 0
  %526 = vperm.xlu0 %525, %v504
  %v527 = vpop.permute.xlu0 %526
  %528 = vset.pattern.permute.xlu0 0
  %529 = vperm.xlu0 %528, %v505
  %v530 = vpop.permute.xlu0 %529
  %531 = vset.pattern.permute.xlu0 0
  %532 = vperm.xlu0 %531, %v506
  %v533 = vpop.permute.xlu0 %532
  %vm534 = vcmp.eq.s32.totalorder %v509, 1
  %vm535 = vcmp.eq.s32.totalorder %v512, 1
  %vm536 = vcmp.eq.s32.totalorder %v515, 1
  %vm537 = vcmp.eq.s32.totalorder %v518, 1
  %vm538 = vcmp.eq.s32.totalorder %v521, 1
  %vm539 = vcmp.eq.s32.totalorder %v524, 1
  %vm540 = vcmp.eq.s32.totalorder %v527, 1
  %vm541 = vcmp.eq.s32.totalorder %v530, 1
  %vm542 = vcmp.eq.s32.totalorder %v533, 1
  %v543 = vsel %vm534, %v489, 0.0
  %v544 = vsel %vm535, %v490, 0.0
  %v545 = vsel %vm536, %v491, 0.0
  %v546 = vsel %vm537, %v492, 0.0
  %v547 = vsel %vm538, %v493, 0.0
  %v548 = vsel %vm539, %v494, 0.0
  %v549 = vsel %vm540, %v495, 0.0
  %v550 = vsel %vm541, %v496, 0.0
  %v551 = vsel %vm542, %v497, 0.0
  %vm552 = vcmask 261120
  %553 = vst.msk [vmem:[#allocation2] sm:$0xff] %vm552, 0.0
  %554 = vst.msk [vmem:[#allocation2 + $0x50] sm:$0xff] %vm552, 0.0
  %555 = vst.msk [vmem:[#allocation2 + $0x8] sm:$0xff] %vm552, %v543
  %556 = vst.msk [vmem:[#allocation2 + $0x10] sm:$0xff] %vm552, %v544
  %557 = vst.msk [vmem:[#allocation2 + $0x18] sm:$0xff] %vm552, %v545
  %558 = vst.msk [vmem:[#allocation2 + $0x20] sm:$0xff] %vm552, %v546
  %559 = vst.msk [vmem:[#allocation2 + $0x28] sm:$0xff] %vm552, %v547
  %560 = vst.msk [vmem:[#allocation2 + $0x30] sm:$0xff] %vm552, %v548
  %561 = vst.msk [vmem:[#allocation2 + $0x38] sm:$0xff] %vm552, %v549
  %562 = vst.msk [vmem:[#allocation2 + $0x40] sm:$0xff] %vm552, %v550
  %563 = vst.msk [vmem:[#allocation2 + $0x48] sm:$0xff] %vm552, %v551
  %v564 = vld [vmem:[#allocation2 + $0x1] sm:$0xff]
  %v565 = vld [vmem:[#allocation2 + $0x9] sm:$0xff]
  %v566 = vld [vmem:[#allocation2 + $0x11] sm:$0xff]
  %v567 = vld [vmem:[#allocation2 + $0x19] sm:$0xff]
  %v568 = vld [vmem:[#allocation2 + $0x21] sm:$0xff]
  %v569 = vld [vmem:[#allocation2 + $0x29] sm:$0xff]
  %v570 = vld [vmem:[#allocation2 + $0x31] sm:$0xff]
  %v571 = vld [vmem:[#allocation2 + $0x39] sm:$0xff]
  %v572 = vld [vmem:[#allocation2 + $0x41] sm:$0xff]
  %v573 = vld [vmem:[#allocation2 + $0x2] sm:$0xff]
  %v574 = vld [vmem:[#allocation2 + $0xa] sm:$0xff]
  %v575 = vld [vmem:[#allocation2 + $0x12] sm:$0xff]
  %v576 = vld [vmem:[#allocation2 + $0x1a] sm:$0xff]
  %v577 = vld [vmem:[#allocation2 + $0x22] sm:$0xff]
  %v578 = vld [vmem:[#allocation2 + $0x2a] sm:$0xff]
  %v579 = vld [vmem:[#allocation2 + $0x32] sm:$0xff]
  %v580 = vld [vmem:[#allocation2 + $0x3a] sm:$0xff]
  %v581 = vld [vmem:[#allocation2 + $0x42] sm:$0xff]
  %v582 = vld [vmem:[#allocation2 + $0x7] sm:$0xff]
  %v583 = vld [vmem:[#allocation2 + $0xf] sm:$0xff]
  %v584 = vld [vmem:[#allocation2 + $0x17] sm:$0xff]
  %v585 = vld [vmem:[#allocation2 + $0x1f] sm:$0xff]
  %v586 = vld [vmem:[#allocation2 + $0x27] sm:$0xff]
  %v587 = vld [vmem:[#allocation2 + $0x2f] sm:$0xff]
  %v588 = vld [vmem:[#allocation2 + $0x37] sm:$0xff]
  %v589 = vld [vmem:[#allocation2 + $0x3f] sm:$0xff]
  %v590 = vld [vmem:[#allocation2 + $0x47] sm:$0xff]
  %v591 = vld [vmem:[#allocation2 + $0x8] sm:$0xff]
  %v592 = vld [vmem:[#allocation2 + $0x10] sm:$0xff]
  %v593 = vld [vmem:[#allocation2 + $0x18] sm:$0xff]
  %v594 = vld [vmem:[#allocation2 + $0x20] sm:$0xff]
  %v595 = vld [vmem:[#allocation2 + $0x28] sm:$0xff]
  %v596 = vld [vmem:[#allocation2 + $0x30] sm:$0xff]
  %v597 = vld [vmem:[#allocation2 + $0x38] sm:$0xff]
  %v598 = vld [vmem:[#allocation2 + $0x40] sm:$0xff]
  %v599 = vld [vmem:[#allocation2 + $0x48] sm:$0xff]
  %609 = vrot.lane.b32.xlu0 %v573, 32
  %v610 = vpop.permute.xlu0 %609
  %611 = vrot.lane.b32.xlu0 %v574, 32
  %v612 = vpop.permute.xlu0 %611
  %613 = vrot.lane.b32.xlu0 %v575, 32
  %v614 = vpop.permute.xlu0 %613
  %615 = vrot.lane.b32.xlu0 %v576, 32
  %v616 = vpop.permute.xlu0 %615
  %617 = vrot.lane.b32.xlu0 %v577, 32
  %v618 = vpop.permute.xlu0 %617
  %619 = vrot.lane.b32.xlu0 %v578, 32
  %v620 = vpop.permute.xlu0 %619
  %621 = vrot.lane.b32.xlu0 %v579, 32
  %v622 = vpop.permute.xlu0 %621
  %623 = vrot.lane.b32.xlu0 %v580, 32
  %v624 = vpop.permute.xlu0 %623
  %625 = vrot.lane.b32.xlu0 %v581, 32
  %v626 = vpop.permute.xlu0 %625
  %645 = vrot.lane.b32.xlu0 %v582, 64
  %v646 = vpop.permute.xlu0 %645
  %647 = vrot.lane.b32.xlu0 %v583, 64
  %v648 = vpop.permute.xlu0 %647
  %649 = vrot.lane.b32.xlu0 %v584, 64
  %v650 = vpop.permute.xlu0 %649
  %651 = vrot.lane.b32.xlu0 %v585, 64
  %v652 = vpop.permute.xlu0 %651
  %653 = vrot.lane.b32.xlu0 %v586, 64
  %v654 = vpop.permute.xlu0 %653
  %655 = vrot.lane.b32.xlu0 %v587, 64
  %v656 = vpop.permute.xlu0 %655
  %657 = vrot.lane.b32.xlu0 %v588, 64
  %v658 = vpop.permute.xlu0 %657
  %659 = vrot.lane.b32.xlu0 %v589, 64
  %v660 = vpop.permute.xlu0 %659
  %661 = vrot.lane.b32.xlu0 %v590, 64
  %v662 = vpop.permute.xlu0 %661
  %681 = vrot.lane.b32.xlu0 %v591, 96
  %v682 = vpop.permute.xlu0 %681
  %683 = vrot.lane.b32.xlu0 %v592, 96
  %v684 = vpop.permute.xlu0 %683
  %685 = vrot.lane.b32.xlu0 %v593, 96
  %v686 = vpop.permute.xlu0 %685
  %687 = vrot.lane.b32.xlu0 %v594, 96
  %v688 = vpop.permute.xlu0 %687
  %689 = vrot.lane.b32.xlu0 %v595, 96
  %v690 = vpop.permute.xlu0 %689
  %691 = vrot.lane.b32.xlu0 %v596, 96
  %v692 = vpop.permute.xlu0 %691
  %693 = vrot.lane.b32.xlu0 %v597, 96
  %v694 = vpop.permute.xlu0 %693
  %695 = vrot.lane.b32.xlu0 %v598, 96
  %v696 = vpop.permute.xlu0 %695
  %697 = vrot.lane.b32.xlu0 %v599, 96
  %v698 = vpop.permute.xlu0 %697
  %v708 = vsel %vm552, %v564, %v610
  %v709 = vsel %vm552, %v565, %v612
  %v710 = vsel %vm552, %v566, %v614
  %v711 = vsel %vm552, %v567, %v616
  %v712 = vsel %vm552, %v568, %v618
  %v713 = vsel %vm552, %v569, %v620
  %v714 = vsel %vm552, %v570, %v622
  %v715 = vsel %vm552, %v571, %v624
  %v716 = vsel %vm552, %v572, %v626
  %v717 = vsel %vm347, %v708, %v646
  %v718 = vsel %vm347, %v709, %v648
  %v719 = vsel %vm347, %v710, %v650
  %v720 = vsel %vm347, %v711, %v652
  %v721 = vsel %vm347, %v712, %v654
  %v722 = vsel %vm347, %v713, %v656
  %v723 = vsel %vm347, %v714, %v658
  %v724 = vsel %vm347, %v715, %v660
  %v725 = vsel %vm347, %v716, %v662
  %v726 = vsel %vm214, %v717, %v682
  %v727 = vsel %vm214, %v718, %v684
  %v728 = vsel %vm214, %v719, %v686
  %v729 = vsel %vm214, %v720, %v688
  %v730 = vsel %vm214, %v721, %v690
  %v731 = vsel %vm214, %v722, %v692
  %v732 = vsel %vm214, %v723, %v694
  %v733 = vsel %vm214, %v724, %v696
  %v734 = vsel %vm214, %v725, %v698
  %v735 = vpack.c.bf16 %v727, %v726
  %v736 = vpack.c.bf16 %v729, %v728
  %v737 = vpack.c.bf16 %v731, %v730
  %v738 = vpack.c.bf16 %v733, %v732
  %v739 = vpack.c.bf16 %v734, %v734
  %v740 = vld [vmem:[%s2] sm:$0xf]
  %v741 = vld [vmem:[%s2 + $0x4] sm:$0xf]
  %v742 = vld [vmem:[%s2 + $0x8] sm:$0xf]
  %v743 = vld [vmem:[%s2 + $0xc] sm:$0xf]
  %v744 = vld [vmem:[%s2 + $0x10] sm:$0xf]
  %v745 = vld [vmem:[%s2 + $0x14] sm:$0xf]
  %v746 = vld [vmem:[%s2 + $0x18] sm:$0xf]
  %v747 = vld [vmem:[%s2 + $0x1c] sm:$0xf]
  %v748 = vld [vmem:[%s2 + $0x20] sm:$0xf]
  %v749 = vld [vmem:[%s2 + $0x24] sm:$0xf]
  %v750 = vld [vmem:[%s2 + $0x28] sm:$0xf]
  %v751 = vld [vmem:[%s2 + $0x2c] sm:$0xf]
  %v752 = vld [vmem:[%s2 + $0x30] sm:$0xf]
  %v753 = vld [vmem:[%s2 + $0x34] sm:$0xf]
  %v754 = vld [vmem:[%s2 + $0x38] sm:$0xf]
  %v755 = vld [vmem:[%s2 + $0x3c] sm:$0xf]
  %v756 = vld [vmem:[%s7] sm:$0x1]
  %v758 = vlaneseq
  %v759 = vshrl.u32 %v758, 7
  %v760 = vsub.s32 0, %v759
  %v761 = vrot.slane %v756, %v760
  %v779 = vunpack.c.l.b16 %v740
  %v780 = vunpack.c.l.b16 %v741
  %v781 = vunpack.c.l.b16 %v742
  %v782 = vunpack.c.l.b16 %v743
  %v783 = vunpack.c.l.b16 %v744
  %v784 = vunpack.c.l.b16 %v745
  %v785 = vunpack.c.l.b16 %v746
  %v786 = vunpack.c.l.b16 %v747
  %v787 = vunpack.c.l.b16 %v748
  %v788 = vunpack.c.l.b16 %v749
  %v789 = vunpack.c.l.b16 %v750
  %v790 = vunpack.c.l.b16 %v751
  %v791 = vunpack.c.l.b16 %v752
  %v792 = vunpack.c.l.b16 %v753
  %v793 = vunpack.c.l.b16 %v754
  %v794 = vunpack.c.l.b16 %v755
  %v795 = vpack.c.b16 %v780, %v779
  %v796 = vpack.c.b16 %v782, %v781
  %v797 = vpack.c.b16 %v784, %v783
  %v798 = vpack.c.b16 %v786, %v785
  %v799 = vpack.c.b16 %v788, %v787
  %v800 = vpack.c.b16 %v790, %v789
  %v801 = vpack.c.b16 %v792, %v791
  %v802 = vpack.c.b16 %v794, %v793
  %811 = vmatprep.subr.bf16.mxu0 0
  %812 = vmatpush1.bf16.msra.mxu0 %v795
  %813 = vmatprep.subr.bf16.mxu0 0
  %814 = vmatpush1.bf16.msra.mxu0 %v796
  %815 = vmatprep.subr.bf16.mxu0 0
  %816 = vmatpush1.bf16.msra.mxu0 %v797
  %817 = vmatprep.subr.bf16.mxu0 0
  %818 = vmatpush1.bf16.msra.mxu0 %v798
  %819 = vmatprep.subr.bf16.mxu0 0
  %820 = vmatpush1.bf16.msra.mxu0 %v799
  %821 = vmatprep.subr.bf16.mxu0 0
  %822 = vmatpush1.bf16.msra.mxu0 %v800
  %823 = vmatprep.subr.bf16.mxu0 0
  %824 = vmatpush1.bf16.msra.mxu0 %v801
  %825 = vmatprep.subr.bf16.mxu0 0
  %826 = vmatpush1.bf16.msra.mxu0 %v802
  %827 = vmatprep.subr.bf16.mxu0 0
  %828 = vmatpush1.bf16.msra.mxu0 0
  %829 = vmatprep.subr.bf16.mxu0 0
  %830 = vmatpush1.bf16.msra.mxu0 0
  %831 = vmatprep.subr.bf16.mxu0 0
  %832 = vmatpush1.bf16.msra.mxu0 0
  %833 = vmatprep.subr.bf16.mxu0 0
  %834 = vmatpush1.bf16.msra.mxu0 0
  %835 = vmatprep.subr.bf16.mxu0 0
  %836 = vmatpush1.bf16.msra.mxu0 0
  %837 = vmatprep.subr.bf16.mxu0 0
  %838 = vmatpush1.bf16.msra.mxu0 0
  %839 = vmatprep.subr.bf16.mxu0 0
  %840 = vmatpush1.bf16.msra.mxu0 0
  %841 = vmatprep.subr.bf16.mxu0 0
  %842 = vmatpush1.bf16.msra.mxu0 0
  %843 = vmatprep.mubr.bf16.mxu0 0
  %844 = vmatmul.mubr.bf16.gmra.mrb[0].mxu0 %v735
  %v845 = vpop.f32.mrb[0].mxu0
  %v846 = vadd.f32 %v761, %v845
  %v847 = vpop.f32.mrb[0].mxu0
  %v848 = vpop.f32.mrb[0].mxu0
  %v849 = vadd.f32 %v761, %v848
  %v850 = vpop.f32.mrb[0].mxu0
  %851 = vmatprep.mubr.bf16.mxu0 0
  %852 = vmatmul.mubr.bf16.gmra.mrb[0].mxu0 %v736
  %v853 = vpop.f32.mrb[0].mxu0
  %v854 = vadd.f32 %v761, %v853
  %v855 = vpop.f32.mrb[0].mxu0
  %v856 = vpop.f32.mrb[0].mxu0
  %v857 = vadd.f32 %v761, %v856
  %v858 = vpop.f32.mrb[0].mxu0
  %859 = vmatprep.mubr.bf16.mxu0 0
  %860 = vmatmul.mubr.bf16.gmra.mrb[0].mxu0 %v737
  %v861 = vpop.f32.mrb[0].mxu0
  %v862 = vadd.f32 %v761, %v861
  %v863 = vpop.f32.mrb[0].mxu0
  %v864 = vpop.f32.mrb[0].mxu0
  %v865 = vadd.f32 %v761, %v864
  %v866 = vpop.f32.mrb[0].mxu0
  %867 = vmatprep.mubr.bf16.mxu0 0
  %868 = vmatmul.mubr.bf16.gmra.mrb[0].mxu0 %v738
  %v869 = vpop.f32.mrb[0].mxu0
  %v870 = vadd.f32 %v761, %v869
  %v871 = vpop.f32.mrb[0].mxu0
  %v872 = vpop.f32.mrb[0].mxu0
  %v873 = vadd.f32 %v761, %v872
  %v874 = vpop.f32.mrb[0].mxu0
  %875 = vmatprep.mubr.bf16.mxu0 0
  %876 = vmatmul.mubr.bf16.gmra.mrb[0].mxu0 %v739
  %v877 = vpop.f32.mrb[0].mxu0
  %v878 = vadd.f32 %v761, %v877
  %v879 = vpop.f32.mrb[0].mxu0
  %v880 = vpop.f32.mrb[0].mxu0
  %v881 = vpop.f32.mrb[0].mxu0
  %882 = vdwg.mxu0
  %v883 = vxor.u32 %v846, 2147483648
  %v884 = vxor.u32 %v849, 2147483648
  %v885 = vxor.u32 %v854, 2147483648
  %v886 = vxor.u32 %v857, 2147483648
  %v887 = vxor.u32 %v862, 2147483648
  %v888 = vxor.u32 %v865, 2147483648
  %v889 = vxor.u32 %v870, 2147483648
  %v890 = vxor.u32 %v873, 2147483648
  %v891 = vxor.u32 %v878, 2147483648
  %v892 = vmul.f32 %v883, 1.442695
  %v893 = vpow.pop %v892
  %v894 = vmul.f32 %v884, 1.442695
  %v895 = vpow.pop %v894
  %v896 = vmul.f32 %v885, 1.442695
  %v897 = vpow.pop %v896
  %v898 = vmul.f32 %v886, 1.442695
  %v899 = vpow.pop %v898
  %v900 = vmul.f32 %v887, 1.442695
  %v901 = vpow.pop %v900
  %v902 = vmul.f32 %v888, 1.442695
  %v903 = vpow.pop %v902
  %v904 = vmul.f32 %v889, 1.442695
  %v905 = vpow.pop %v904
  %v906 = vmul.f32 %v890, 1.442695
  %v907 = vpow.pop %v906
  %v908 = vmul.f32 %v891, 1.442695
  %v909 = vpow.pop %v908
  %v910 = vadd.f32 %v893, 1.0
  %v911 = vadd.f32 %v895, 1.0
  %v912 = vadd.f32 %v897, 1.0
  %v913 = vadd.f32 %v899, 1.0
  %v914 = vadd.f32 %v901, 1.0
  %v915 = vadd.f32 %v903, 1.0
  %v916 = vadd.f32 %v905, 1.0
  %v917 = vadd.f32 %v907, 1.0
  %v918 = vadd.f32 %v909, 1.0
  %v919 = vrcp.pop %v910
  %v920 = vmul.f32 1.0, %v919
  %v921 = vrcp.pop %v911
  %v922 = vmul.f32 1.0, %v921
  %v923 = vrcp.pop %v912
  %v924 = vmul.f32 1.0, %v923
  %v925 = vrcp.pop %v913
  %v926 = vmul.f32 1.0, %v925
  %v927 = vrcp.pop %v914
  %v928 = vmul.f32 1.0, %v927
  %v929 = vrcp.pop %v915
  %v930 = vmul.f32 1.0, %v929
  %v931 = vrcp.pop %v916
  %v932 = vmul.f32 1.0, %v931
  %v933 = vrcp.pop %v917
  %v934 = vmul.f32 1.0, %v933
  %v935 = vrcp.pop %v918
  %v936 = vmul.f32 1.0, %v935
  %v937 = vmul.f32 %v846, %v920
  %v938 = vmul.f32 %v849, %v922
  %v939 = vmul.f32 %v854, %v924
  %v940 = vmul.f32 %v857, %v926
  %v941 = vmul.f32 %v862, %v928
  %v942 = vmul.f32 %v865, %v930
  %v943 = vmul.f32 %v870, %v932
  %v944 = vmul.f32 %v873, %v934
  %v945 = vmul.f32 %v878, %v936
  %v946 = vsel %vm534, %v937, 0.0
  %v947 = vsel %vm535, %v938, 0.0
  %v948 = vsel %vm536, %v939, 0.0
  %v949 = vsel %vm537, %v940, 0.0
  %v950 = vsel %vm538, %v941, 0.0
  %v951 = vsel %vm539, %v942, 0.0
  %v952 = vsel %vm540, %v943, 0.0
  %v953 = vsel %vm541, %v944, 0.0
  %v954 = vsel %vm542, %v945, 0.0
  %955 = vst.msk [vmem:[#allocation3] sm:$0xff] %vm224, 0.0
  %956 = vst.msk [vmem:[#allocation3 + $0x50] sm:$0xff] %vm224, 0.0
  %957 = vst.msk [vmem:[#allocation3 + $0x8] sm:$0xff] %vm224, %v946
  %958 = vst.msk [vmem:[#allocation3 + $0x10] sm:$0xff] %vm224, %v947
  %959 = vst.msk [vmem:[#allocation3 + $0x18] sm:$0xff] %vm224, %v948
  %960 = vst.msk [vmem:[#allocation3 + $0x20] sm:$0xff] %vm224, %v949
  %961 = vst.msk [vmem:[#allocation3 + $0x28] sm:$0xff] %vm224, %v950
  %962 = vst.msk [vmem:[#allocation3 + $0x30] sm:$0xff] %vm224, %v951
  %963 = vst.msk [vmem:[#allocation3 + $0x38] sm:$0xff] %vm224, %v952
  %964 = vst.msk [vmem:[#allocation3 + $0x40] sm:$0xff] %vm224, %v953
  %965 = vst.msk [vmem:[#allocation3 + $0x48] sm:$0xff] %vm224, %v954
  %v966 = vld [vmem:[#allocation3 + $0x1] sm:$0xff]
  %v967 = vld [vmem:[#allocation3 + $0x9] sm:$0xff]
  %v968 = vld [vmem:[#allocation3 + $0x11] sm:$0xff]
  %v969 = vld [vmem:[#allocation3 + $0x19] sm:$0xff]
  %v970 = vld [vmem:[#allocation3 + $0x21] sm:$0xff]
  %v971 = vld [vmem:[#allocation3 + $0x29] sm:$0xff]
  %v972 = vld [vmem:[#allocation3 + $0x31] sm:$0xff]
  %v973 = vld [vmem:[#allocation3 + $0x39] sm:$0xff]
  %v974 = vld [vmem:[#allocation3 + $0x41] sm:$0xff]
  %v975 = vld [vmem:[#allocation3 + $0x2] sm:$0xff]
  %v976 = vld [vmem:[#allocation3 + $0xa] sm:$0xff]
  %v977 = vld [vmem:[#allocation3 + $0x12] sm:$0xff]
  %v978 = vld [vmem:[#allocation3 + $0x1a] sm:$0xff]
  %v979 = vld [vmem:[#allocation3 + $0x22] sm:$0xff]
  %v980 = vld [vmem:[#allocation3 + $0x2a] sm:$0xff]
  %v981 = vld [vmem:[#allocation3 + $0x32] sm:$0xff]
  %v982 = vld [vmem:[#allocation3 + $0x3a] sm:$0xff]
  %v983 = vld [vmem:[#allocation3 + $0x42] sm:$0xff]
  %v984 = vld [vmem:[#allocation3 + $0x3] sm:$0xff]
  %v985 = vld [vmem:[#allocation3 + $0xb] sm:$0xff]
  %v986 = vld [vmem:[#allocation3 + $0x13] sm:$0xff]
  %v987 = vld [vmem:[#allocation3 + $0x1b] sm:$0xff]
  %v988 = vld [vmem:[#allocation3 + $0x23] sm:$0xff]
  %v989 = vld [vmem:[#allocation3 + $0x2b] sm:$0xff]
  %v990 = vld [vmem:[#allocation3 + $0x33] sm:$0xff]
  %v991 = vld [vmem:[#allocation3 + $0x3b] sm:$0xff]
  %v992 = vld [vmem:[#allocation3 + $0x43] sm:$0xff]
  %v993 = vld [vmem:[#allocation3 + $0x7] sm:$0xff]
  %v994 = vld [vmem:[#allocation3 + $0xf] sm:$0xff]
  %v995 = vld [vmem:[#allocation3 + $0x17] sm:$0xff]
  %v996 = vld [vmem:[#allocation3 + $0x1f] sm:$0xff]
  %v997 = vld [vmem:[#allocation3 + $0x27] sm:$0xff]
  %v998 = vld [vmem:[#allocation3 + $0x2f] sm:$0xff]
  %v999 = vld [vmem:[#allocation3 + $0x37] sm:$0xff]
  %v1000 = vld [vmem:[#allocation3 + $0x3f] sm:$0xff]
  %v1001 = vld [vmem:[#allocation3 + $0x47] sm:$0xff]
  %v1002 = vld [vmem:[#allocation3 + $0x8] sm:$0xff]
  %v1003 = vld [vmem:[#allocation3 + $0x10] sm:$0xff]
  %v1004 = vld [vmem:[#allocation3 + $0x18] sm:$0xff]
  %v1005 = vld [vmem:[#allocation3 + $0x20] sm:$0xff]
  %v1006 = vld [vmem:[#allocation3 + $0x28] sm:$0xff]
  %v1007 = vld [vmem:[#allocation3 + $0x30] sm:$0xff]
  %v1008 = vld [vmem:[#allocation3 + $0x38] sm:$0xff]
  %v1009 = vld [vmem:[#allocation3 + $0x40] sm:$0xff]
  %v1010 = vld [vmem:[#allocation3 + $0x48] sm:$0xff]
  %v1011 = vld [vmem:[#allocation3 + $0x49] sm:$0xff]
  %v1012 = vld [vmem:[#allocation3 + $0xd] sm:$0xff]
  %v1013 = vld [vmem:[#allocation3 + $0x15] sm:$0xff]
  %v1014 = vld [vmem:[#allocation3 + $0x1d] sm:$0xff]
  %v1015 = vld [vmem:[#allocation3 + $0x25] sm:$0xff]
  %v1016 = vld [vmem:[#allocation3 + $0x2d] sm:$0xff]
  %v1017 = vld [vmem:[#allocation3 + $0x35] sm:$0xff]
  %v1018 = vld [vmem:[#allocation3 + $0x3d] sm:$0xff]
  %v1019 = vld [vmem:[#allocation3 + $0x45] sm:$0xff]
  %v1020 = vld [vmem:[#allocation3 + $0x4d] sm:$0xff]
  %v1021 = vld [vmem:[#allocation3 + $0xe] sm:$0xff]
  %v1022 = vld [vmem:[#allocation3 + $0x16] sm:$0xff]
  %v1023 = vld [vmem:[#allocation3 + $0x1e] sm:$0xff]
  %v1024 = vld [vmem:[#allocation3 + $0x26] sm:$0xff]
  %v1025 = vld [vmem:[#allocation3 + $0x2e] sm:$0xff]
  %v1026 = vld [vmem:[#allocation3 + $0x36] sm:$0xff]
  %v1027 = vld [vmem:[#allocation3 + $0x3e] sm:$0xff]
  %v1028 = vld [vmem:[#allocation3 + $0x46] sm:$0xff]
  %v1029 = vld [vmem:[#allocation3 + $0x4e] sm:$0xff]
  %v1030 = vld [vmem:[#allocation3 + $0x4f] sm:$0xff]
  %1040 = vrot.lane.b32.xlu0 %v975, 16
  %v1041 = vpop.permute.xlu0 %1040
  %1042 = vrot.lane.b32.xlu0 %v976, 16
  %v1043 = vpop.permute.xlu0 %1042
  %1044 = vrot.lane.b32.xlu0 %v977, 16
  %v1045 = vpop.permute.xlu0 %1044
  %1046 = vrot.lane.b32.xlu0 %v978, 16
  %v1047 = vpop.permute.xlu0 %1046
  %1048 = vrot.lane.b32.xlu0 %v979, 16
  %v1049 = vpop.permute.xlu0 %1048
  %1050 = vrot.lane.b32.xlu0 %v980, 16
  %v1051 = vpop.permute.xlu0 %1050
  %1052 = vrot.lane.b32.xlu0 %v981, 16
  %v1053 = vpop.permute.xlu0 %1052
  %1054 = vrot.lane.b32.xlu0 %v982, 16
  %v1055 = vpop.permute.xlu0 %1054
  %1056 = vrot.lane.b32.xlu0 %v983, 16
  %v1057 = vpop.permute.xlu0 %1056
  %1076 = vrot.lane.b32.xlu0 %v984, 32
  %v1077 = vpop.permute.xlu0 %1076
  %1078 = vrot.lane.b32.xlu0 %v985, 32
  %v1079 = vpop.permute.xlu0 %1078
  %1080 = vrot.lane.b32.xlu0 %v986, 32
  %v1081 = vpop.permute.xlu0 %1080
  %1082 = vrot.lane.b32.xlu0 %v987, 32
  %v1083 = vpop.permute.xlu0 %1082
  %1084 = vrot.lane.b32.xlu0 %v988, 32
  %v1085 = vpop.permute.xlu0 %1084
  %1086 = vrot.lane.b32.xlu0 %v989, 32
  %v1087 = vpop.permute.xlu0 %1086
  %1088 = vrot.lane.b32.xlu0 %v990, 32
  %v1089 = vpop.permute.xlu0 %1088
  %1090 = vrot.lane.b32.xlu0 %v991, 32
  %v1091 = vpop.permute.xlu0 %1090
  %1092 = vrot.lane.b32.xlu0 %v992, 32
  %v1093 = vpop.permute.xlu0 %1092
  %1112 = vrot.lane.b32.xlu0 %v993, 48
  %v1113 = vpop.permute.xlu0 %1112
  %1114 = vrot.lane.b32.xlu0 %v994, 48
  %v1115 = vpop.permute.xlu0 %1114
  %1116 = vrot.lane.b32.xlu0 %v995, 48
  %v1117 = vpop.permute.xlu0 %1116
  %1118 = vrot.lane.b32.xlu0 %v996, 48
  %v1119 = vpop.permute.xlu0 %1118
  %1120 = vrot.lane.b32.xlu0 %v997, 48
  %v1121 = vpop.permute.xlu0 %1120
  %1122 = vrot.lane.b32.xlu0 %v998, 48
  %v1123 = vpop.permute.xlu0 %1122
  %1124 = vrot.lane.b32.xlu0 %v999, 48
  %v1125 = vpop.permute.xlu0 %1124
  %1126 = vrot.lane.b32.xlu0 %v1000, 48
  %v1127 = vpop.permute.xlu0 %1126
  %1128 = vrot.lane.b32.xlu0 %v1001, 48
  %v1129 = vpop.permute.xlu0 %1128
  %1148 = vrot.lane.b32.xlu0 %v1002, 64
  %v1149 = vpop.permute.xlu0 %1148
  %1150 = vrot.lane.b32.xlu0 %v1003, 64
  %v1151 = vpop.permute.xlu0 %1150
  %1152 = vrot.lane.b32.xlu0 %v1004, 64
  %v1153 = vpop.permute.xlu0 %1152
  %1154 = vrot.lane.b32.xlu0 %v1005, 64
  %v1155 = vpop.permute.xlu0 %1154
  %1156 = vrot.lane.b32.xlu0 %v1006, 64
  %v1157 = vpop.permute.xlu0 %1156
  %1158 = vrot.lane.b32.xlu0 %v1007, 64
  %v1159 = vpop.permute.xlu0 %1158
  %1160 = vrot.lane.b32.xlu0 %v1008, 64
  %v1161 = vpop.permute.xlu0 %1160
  %1162 = vrot.lane.b32.xlu0 %v1009, 64
  %v1163 = vpop.permute.xlu0 %1162
  %1164 = vrot.lane.b32.xlu0 %v1010, 64
  %v1165 = vpop.permute.xlu0 %1164
  %1184 = vrot.lane.b32.xlu0 %v967, 80
  %v1185 = vpop.permute.xlu0 %1184
  %1186 = vrot.lane.b32.xlu0 %v968, 80
  %v1187 = vpop.permute.xlu0 %1186
  %1188 = vrot.lane.b32.xlu0 %v969, 80
  %v1189 = vpop.permute.xlu0 %1188
  %1190 = vrot.lane.b32.xlu0 %v970, 80
  %v1191 = vpop.permute.xlu0 %1190
  %1192 = vrot.lane.b32.xlu0 %v971, 80
  %v1193 = vpop.permute.xlu0 %1192
  %1194 = vrot.lane.b32.xlu0 %v972, 80
  %v1195 = vpop.permute.xlu0 %1194
  %1196 = vrot.lane.b32.xlu0 %v973, 80
  %v1197 = vpop.permute.xlu0 %1196
  %1198 = vrot.lane.b32.xlu0 %v974, 80
  %v1199 = vpop.permute.xlu0 %1198
  %1200 = vrot.lane.b32.xlu0 %v1011, 80
  %v1201 = vpop.permute.xlu0 %1200
  %1220 = vrot.lane.b32.xlu0 %v1012, 96
  %v1221 = vpop.permute.xlu0 %1220
  %1222 = vrot.lane.b32.xlu0 %v1013, 96
  %v1223 = vpop.permute.xlu0 %1222
  %1224 = vrot.lane.b32.xlu0 %v1014, 96
  %v1225 = vpop.permute.xlu0 %1224
  %1226 = vrot.lane.b32.xlu0 %v1015, 96
  %v1227 = vpop.permute.xlu0 %1226
  %1228 = vrot.lane.b32.xlu0 %v1016, 96
  %v1229 = vpop.permute.xlu0 %1228
  %1230 = vrot.lane.b32.xlu0 %v1017, 96
  %v1231 = vpop.permute.xlu0 %1230
  %1232 = vrot.lane.b32.xlu0 %v1018, 96
  %v1233 = vpop.permute.xlu0 %1232
  %1234 = vrot.lane.b32.xlu0 %v1019, 96
  %v1235 = vpop.permute.xlu0 %1234
  %1236 = vrot.lane.b32.xlu0 %v1020, 96
  %v1237 = vpop.permute.xlu0 %1236
  %1256 = vrot.lane.b32.xlu0 %v1021, 112
  %v1257 = vpop.permute.xlu0 %1256
  %1258 = vrot.lane.b32.xlu0 %v1022, 112
  %v1259 = vpop.permute.xlu0 %1258
  %1260 = vrot.lane.b32.xlu0 %v1023, 112
  %v1261 = vpop.permute.xlu0 %1260
  %1262 = vrot.lane.b32.xlu0 %v1024, 112
  %v1263 = vpop.permute.xlu0 %1262
  %1264 = vrot.lane.b32.xlu0 %v1025, 112
  %v1265 = vpop.permute.xlu0 %1264
  %1266 = vrot.lane.b32.xlu0 %v1026, 112
  %v1267 = vpop.permute.xlu0 %1266
  %1268 = vrot.lane.b32.xlu0 %v1027, 112
  %v1269 = vpop.permute.xlu0 %1268
  %1270 = vrot.lane.b32.xlu0 %v1028, 112
  %v1271 = vpop.permute.xlu0 %1270
  %1272 = vrot.lane.b32.xlu0 %v1029, 112
  %v1273 = vpop.permute.xlu0 %1272
  %v1283 = vsel %vm224, %v966, %v1041
  %v1284 = vsel %vm224, %v967, %v1043
  %v1285 = vsel %vm224, %v968, %v1045
  %v1286 = vsel %vm224, %v969, %v1047
  %v1287 = vsel %vm224, %v970, %v1049
  %v1288 = vsel %vm224, %v971, %v1051
  %v1289 = vsel %vm224, %v972, %v1053
  %v1290 = vsel %vm224, %v973, %v1055
  %v1291 = vsel %vm224, %v974, %v1057
  %v1292 = vsel %vm552, %v1283, %v1077
  %v1293 = vsel %vm552, %v1284, %v1079
  %v1294 = vsel %vm552, %v1285, %v1081
  %v1295 = vsel %vm552, %v1286, %v1083
  %v1296 = vsel %vm552, %v1287, %v1085
  %v1297 = vsel %vm552, %v1288, %v1087
  %v1298 = vsel %vm552, %v1289, %v1089
  %v1299 = vsel %vm552, %v1290, %v1091
  %v1300 = vsel %vm552, %v1291, %v1093
  %v1301 = vsel %vm204, %v1292, %v1113
  %v1302 = vsel %vm204, %v1293, %v1115
  %v1303 = vsel %vm204, %v1294, %v1117
  %v1304 = vsel %vm204, %v1295, %v1119
  %v1305 = vsel %vm204, %v1296, %v1121
  %v1306 = vsel %vm204, %v1297, %v1123
  %v1307 = vsel %vm204, %v1298, %v1125
  %v1308 = vsel %vm204, %v1299, %v1127
  %v1309 = vsel %vm204, %v1300, %v1129
  %v1310 = vsel %vm347, %v1301, %v1149
  %v1311 = vsel %vm347, %v1302, %v1151
  %v1312 = vsel %vm347, %v1303, %v1153
  %v1313 = vsel %vm347, %v1304, %v1155
  %v1314 = vsel %vm347, %v1305, %v1157
  %v1315 = vsel %vm347, %v1306, %v1159
  %v1316 = vsel %vm347, %v1307, %v1161
  %v1317 = vsel %vm347, %v1308, %v1163
  %v1318 = vsel %vm347, %v1309, %v1165
  %vm1319 = vcmask 654336
  %v1320 = vsel %vm1319, %v1310, %v1185
  %v1321 = vsel %vm1319, %v1311, %v1187
  %v1322 = vsel %vm1319, %v1312, %v1189
  %v1323 = vsel %vm1319, %v1313, %v1191
  %v1324 = vsel %vm1319, %v1314, %v1193
  %v1325 = vsel %vm1319, %v1315, %v1195
  %v1326 = vsel %vm1319, %v1316, %v1197
  %v1327 = vsel %vm1319, %v1317, %v1199
  %v1328 = vsel %vm1319, %v1318, %v1201
  %v1329 = vsel %vm214, %v1320, %v1221
  %v1330 = vsel %vm214, %v1321, %v1223
  %v1331 = vsel %vm214, %v1322, %v1225
  %v1332 = vsel %vm214, %v1323, %v1227
  %v1333 = vsel %vm214, %v1324, %v1229
  %v1334 = vsel %vm214, %v1325, %v1231
  %v1335 = vsel %vm214, %v1326, %v1233
  %v1336 = vsel %vm214, %v1327, %v1235
  %v1337 = vsel %vm214, %v1328, %v1237
  %vm1338 = vcmask 916480
  %v1339 = vsel %vm1338, %v1329, %v1257
  %v1340 = vsel %vm1338, %v1330, %v1259
  %v1341 = vsel %vm1338, %v1331, %v1261
  %v1342 = vsel %vm1338, %v1332, %v1263
  %v1343 = vsel %vm1338, %v1333, %v1265
  %v1344 = vsel %vm1338, %v1334, %v1267
  %v1345 = vsel %vm1338, %v1335, %v1269
  %v1346 = vsel %vm1338, %v1336, %v1271
  %v1347 = vsel %vm1338, %v1337, %v1273
  %v1348 = vpack.c.bf16 %v1340, %v1339
  %v1349 = vpack.c.bf16 %v995, %v994
  %v1350 = vpack.c.bf16 %v1342, %v1341
  %v1351 = vpack.c.bf16 %v997, %v996
  %v1352 = vpack.c.bf16 %v1344, %v1343
  %v1353 = vpack.c.bf16 %v999, %v998
  %v1354 = vpack.c.bf16 %v1346, %v1345
  %v1355 = vpack.c.bf16 %v1001, %v1000
  %v1356 = vpack.c.bf16 %v1347, %v1347
  %v1357 = vpack.c.bf16 %v1030, %v1030
  %v1358 = vld [vmem:[%s3] sm:$0xf]
  %v1359 = vld [vmem:[%s3 + $0x4] sm:$0xf]
  %v1360 = vld [vmem:[%s3 + $0x8] sm:$0xf]
  %v1361 = vld [vmem:[%s3 + $0xc] sm:$0xf]
  %v1362 = vld [vmem:[%s3 + $0x10] sm:$0xf]
  %v1363 = vld [vmem:[%s3 + $0x14] sm:$0xf]
  %v1364 = vld [vmem:[%s3 + $0x18] sm:$0xf]
  %v1365 = vld [vmem:[%s3 + $0x1c] sm:$0xf]
  %v1366 = vld [vmem:[%s3 + $0x20] sm:$0xf]
  %v1367 = vld [vmem:[%s3 + $0x24] sm:$0xf]
  %v1368 = vld [vmem:[%s3 + $0x28] sm:$0xf]
  %v1369 = vld [vmem:[%s3 + $0x2c] sm:$0xf]
  %v1370 = vld [vmem:[%s3 + $0x30] sm:$0xf]
  %v1371 = vld [vmem:[%s3 + $0x34] sm:$0xf]
  %v1372 = vld [vmem:[%s3 + $0x38] sm:$0xf]
  %v1373 = vld [vmem:[%s3 + $0x3c] sm:$0xf]
  %v1374 = vld [vmem:[%s3 + $0x40] sm:$0xf]
  %v1375 = vld [vmem:[%s3 + $0x44] sm:$0xf]
  %v1376 = vld [vmem:[%s8] sm:$0x1]
  %v1378 = vlaneseq
  %v1379 = vshrl.u32 %v1378, 7
  %v1380 = vsub.s32 0, %v1379
  %v1381 = vrot.slane %v1376, %v1380
  %v1401 = vunpack.c.l.b16 %v1358
  %v1402 = vunpack.c.l.b16 %v1359
  %v1403 = vunpack.c.l.b16 %v1360
  %v1404 = vunpack.c.l.b16 %v1361
  %v1405 = vunpack.c.l.b16 %v1362
  %v1406 = vunpack.c.l.b16 %v1363
  %v1407 = vunpack.c.l.b16 %v1364
  %v1408 = vunpack.c.l.b16 %v1365
  %v1409 = vunpack.c.l.b16 %v1366
  %v1410 = vunpack.c.l.b16 %v1367
  %v1411 = vunpack.c.l.b16 %v1368
  %v1412 = vunpack.c.l.b16 %v1369
  %v1413 = vunpack.c.l.b16 %v1370
  %v1414 = vunpack.c.l.b16 %v1371
  %v1415 = vunpack.c.l.b16 %v1372
  %v1416 = vunpack.c.l.b16 %v1373
  %v1417 = vunpack.c.l.b16 %v1374
  %v1418 = vunpack.c.l.b16 %v1375
  %v1419 = vpack.c.b16 %v1402, %v1401
  %v1420 = vpack.c.b16 %v1404, %v1403
  %v1421 = vpack.c.b16 %v1406, %v1405
  %v1422 = vpack.c.b16 %v1408, %v1407
  %v1423 = vpack.c.b16 %v1410, %v1409
  %v1424 = vpack.c.b16 %v1412, %v1411
  %v1425 = vpack.c.b16 %v1414, %v1413
  %v1426 = vpack.c.b16 %v1416, %v1415
  %v1427 = vpack.c.b16 %v1418, %v1417
  %v1438 = vsel %vm224, %v1349, 0
  %v1441 = vsel %vm224, %v1351, 0
  %v1444 = vsel %vm224, %v1353, 0
  %v1447 = vsel %vm224, %v1355, 0
  %v1450 = vsel %vm224, %v1357, 0
  %1452 = vmatprep.subr.bf16.mxu0 0
  %1453 = vmatpush1.bf16.msra.mxu0 %v1419
  %1454 = vmatprep.subr.bf16.mxu0 0
  %1455 = vmatpush1.bf16.msra.mxu0 %v1420
  %1456 = vmatprep.subr.bf16.mxu0 0
  %1457 = vmatpush1.bf16.msra.mxu0 %v1421
  %1458 = vmatprep.subr.bf16.mxu0 0
  %1459 = vmatpush1.bf16.msra.mxu0 %v1422
  %1460 = vmatprep.subr.bf16.mxu0 0
  %1461 = vmatpush1.bf16.msra.mxu0 %v1423
  %1462 = vmatprep.subr.bf16.mxu0 0
  %1463 = vmatpush1.bf16.msra.mxu0 %v1424
  %1464 = vmatprep.subr.bf16.mxu0 0
  %1465 = vmatpush1.bf16.msra.mxu0 %v1425
  %1466 = vmatprep.subr.bf16.mxu0 0
  %1467 = vmatpush1.bf16.msra.mxu0 %v1426
  %1468 = vmatprep.subr.bf16.mxu0 0
  %1469 = vmatpush1.bf16.msra.mxu0 %v1427
  %1470 = vmatprep.subr.bf16.mxu0 0
  %1471 = vmatpush1.bf16.msra.mxu0 0
  %1472 = vmatprep.subr.bf16.mxu0 0
  %1473 = vmatpush1.bf16.msra.mxu0 0
  %1474 = vmatprep.subr.bf16.mxu0 0
  %1475 = vmatpush1.bf16.msra.mxu0 0
  %1476 = vmatprep.subr.bf16.mxu0 0
  %1477 = vmatpush1.bf16.msra.mxu0 0
  %1478 = vmatprep.subr.bf16.mxu0 0
  %1479 = vmatpush1.bf16.msra.mxu0 0
  %1480 = vmatprep.subr.bf16.mxu0 0
  %1481 = vmatpush1.bf16.msra.mxu0 0
  %1482 = vmatprep.subr.bf16.mxu0 0
  %1483 = vmatpush1.bf16.msra.mxu0 0
  %1484 = vmatprep.mubr.bf16.mxu0 %v1438
  %1485 = vmatmul.mubr.bf16.gmra.mrb[0].mxu0 %v1348
  %v1486 = vpop.f32.mrb[0].mxu0
  %v1487 = vadd.f32 %v1381, %v1486
  %v1488 = vpop.f32.mrb[0].mxu0
  %v1489 = vpop.f32.mrb[0].mxu0
  %v1490 = vadd.f32 %v1381, %v1489
  %v1491 = vpop.f32.mrb[0].mxu0
  %1492 = vmatprep.mubr.bf16.mxu0 %v1441
  %1493 = vmatmul.mubr.bf16.gmra.mrb[0].mxu0 %v1350
  %v1494 = vpop.f32.mrb[0].mxu0
  %v1495 = vadd.f32 %v1381, %v1494
  %v1496 = vpop.f32.mrb[0].mxu0
  %v1497 = vpop.f32.mrb[0].mxu0
  %v1498 = vadd.f32 %v1381, %v1497
  %v1499 = vpop.f32.mrb[0].mxu0
  %1500 = vmatprep.mubr.bf16.mxu0 %v1444
  %1501 = vmatmul.mubr.bf16.gmra.mrb[0].mxu0 %v1352
  %v1502 = vpop.f32.mrb[0].mxu0
  %v1503 = vadd.f32 %v1381, %v1502
  %v1504 = vpop.f32.mrb[0].mxu0
  %v1505 = vpop.f32.mrb[0].mxu0
  %v1506 = vadd.f32 %v1381, %v1505
  %v1507 = vpop.f32.mrb[0].mxu0
  %1508 = vmatprep.mubr.bf16.mxu0 %v1447
  %1509 = vmatmul.mubr.bf16.gmra.mrb[0].mxu0 %v1354
  %v1510 = vpop.f32.mrb[0].mxu0
  %v1511 = vadd.f32 %v1381, %v1510
  %v1512 = vpop.f32.mrb[0].mxu0
  %v1513 = vpop.f32.mrb[0].mxu0
  %v1514 = vadd.f32 %v1381, %v1513
  %v1515 = vpop.f32.mrb[0].mxu0
  %1516 = vmatprep.mubr.bf16.mxu0 %v1450
  %1517 = vmatmul.mubr.bf16.gmra.mrb[0].mxu0 %v1356
  %v1518 = vpop.f32.mrb[0].mxu0
  %v1519 = vadd.f32 %v1381, %v1518
  %v1520 = vpop.f32.mrb[0].mxu0
  %v1521 = vpop.f32.mrb[0].mxu0
  %v1522 = vpop.f32.mrb[0].mxu0
  %1523 = vdwg.mxu0
  %v1524 = vxor.u32 %v1487, 2147483648
  %v1525 = vxor.u32 %v1490, 2147483648
  %v1526 = vxor.u32 %v1495, 2147483648
  %v1527 = vxor.u32 %v1498, 2147483648
  %v1528 = vxor.u32 %v1503, 2147483648
  %v1529 = vxor.u32 %v1506, 2147483648
  %v1530 = vxor.u32 %v1511, 2147483648
  %v1531 = vxor.u32 %v1514, 2147483648
  %v1532 = vxor.u32 %v1519, 2147483648
  %v1533 = vmul.f32 %v1524, 1.442695
  %v1534 = vpow.pop %v1533
  %v1535 = vmul.f32 %v1525, 1.442695
  %v1536 = vpow.pop %v1535
  %v1537 = vmul.f32 %v1526, 1.442695
  %v1538 = vpow.pop %v1537
  %v1539 = vmul.f32 %v1527, 1.442695
  %v1540 = vpow.pop %v1539
  %v1541 = vmul.f32 %v1528, 1.442695
  %v1542 = vpow.pop %v1541
  %v1543 = vmul.f32 %v1529, 1.442695
  %v1544 = vpow.pop %v1543
  %v1545 = vmul.f32 %v1530, 1.442695
  %v1546 = vpow.pop %v1545
  %v1547 = vmul.f32 %v1531, 1.442695
  %v1548 = vpow.pop %v1547
  %v1549 = vmul.f32 %v1532, 1.442695
  %v1550 = vpow.pop %v1549
  %v1551 = vadd.f32 %v1534, 1.0
  %v1552 = vadd.f32 %v1536, 1.0
  %v1553 = vadd.f32 %v1538, 1.0
  %v1554 = vadd.f32 %v1540, 1.0
  %v1555 = vadd.f32 %v1542, 1.0
  %v1556 = vadd.f32 %v1544, 1.0
  %v1557 = vadd.f32 %v1546, 1.0
  %v1558 = vadd.f32 %v1548, 1.0
  %v1559 = vadd.f32 %v1550, 1.0
  %v1560 = vrcp.pop %v1551
  %v1561 = vmul.f32 1.0, %v1560
  %v1562 = vrcp.pop %v1552
  %v1563 = vmul.f32 1.0, %v1562
  %v1564 = vrcp.pop %v1553
  %v1565 = vmul.f32 1.0, %v1564
  %v1566 = vrcp.pop %v1554
  %v1567 = vmul.f32 1.0, %v1566
  %v1568 = vrcp.pop %v1555
  %v1569 = vmul.f32 1.0, %v1568
  %v1570 = vrcp.pop %v1556
  %v1571 = vmul.f32 1.0, %v1570
  %v1572 = vrcp.pop %v1557
  %v1573 = vmul.f32 1.0, %v1572
  %v1574 = vrcp.pop %v1558
  %v1575 = vmul.f32 1.0, %v1574
  %v1576 = vrcp.pop %v1559
  %v1577 = vmul.f32 1.0, %v1576
  %v1578 = vmul.f32 %v1487, %v1561
  %v1579 = vmul.f32 %v1490, %v1563
  %v1580 = vmul.f32 %v1495, %v1565
  %v1581 = vmul.f32 %v1498, %v1567
  %v1582 = vmul.f32 %v1503, %v1569
  %v1583 = vmul.f32 %v1506, %v1571
  %v1584 = vmul.f32 %v1511, %v1573
  %v1585 = vmul.f32 %v1514, %v1575
  %v1586 = vmul.f32 %v1519, %v1577
  %v1587 = vpack.c.bf16 %v1579, %v1578
  %v1588 = vpack.c.bf16 %v1581, %v1580
  %v1589 = vpack.c.bf16 %v1583, %v1582
  %v1590 = vpack.c.bf16 %v1585, %v1584
  %v1591 = vpack.c.bf16 %v1586, %v1586
  %v1592 = vld [vmem:[%s4] sm:$0xf]
  %v1593 = vld [vmem:[%s4 + $0x4] sm:$0xf]
  %v1594 = vpack.c.bf16 %v947, %v946
  %v1595 = vpack.c.bf16 %v949, %v948
  %v1596 = vpack.c.bf16 %v951, %v950
  %v1597 = vpack.c.bf16 %v953, %v952
  %v1598 = vpack.c.bf16 %v954, %v954
  %v1599 = vld [vmem:[%s4 + $0x8] sm:$0xf]
  %v1600 = vld [vmem:[%s4 + $0xc] sm:$0xf]
  %v1603 = vunpack.c.l.b16 %v1599
  %v1604 = vunpack.c.l.b16 %v1600
  %v1605 = vpack.c.b16 %v1604, %v1603
  %v1608 = vsel %vm224, %v1594, 0
  %v1611 = vsel %vm224, %v1595, 0
  %v1614 = vsel %vm224, %v1596, 0
  %v1617 = vsel %vm224, %v1597, 0
  %v1620 = vsel %vm224, %v1598, 0
  %1622 = vmatprep.subr.bf16.mxu0 0
  %1623 = vmatpush1.bf16.msra.mxu0 %v1605
  %1624 = vmatprep.subr.bf16.mxu0 0
  %1625 = vmatpush1.bf16.msra.mxu0 0
  %1626 = vmatprep.subr.bf16.mxu0 0
  %1627 = vmatpush1.bf16.msra.mxu0 0
  %1628 = vmatprep.subr.bf16.mxu0 0
  %1629 = vmatpush1.bf16.msra.mxu0 0
  %1630 = vmatprep.subr.bf16.mxu0 0
  %1631 = vmatpush1.bf16.msra.mxu0 0
  %1632 = vmatprep.subr.bf16.mxu0 0
  %1633 = vmatpush1.bf16.msra.mxu0 0
  %1634 = vmatprep.subr.bf16.mxu0 0
  %1635 = vmatpush1.bf16.msra.mxu0 0
  %1636 = vmatprep.subr.bf16.mxu0 0
  %1637 = vmatpush1.bf16.msra.mxu0 0
  %1638 = vmatprep.subr.bf16.mxu0 0
  %1639 = vmatpush1.bf16.msra.mxu0 0
  %1640 = vmatprep.subr.bf16.mxu0 0
  %1641 = vmatpush1.bf16.msra.mxu0 0
  %1642 = vmatprep.subr.bf16.mxu0 0
  %1643 = vmatpush1.bf16.msra.mxu0 0
  %1644 = vmatprep.subr.bf16.mxu0 0
  %1645 = vmatpush1.bf16.msra.mxu0 0
  %1646 = vmatprep.subr.bf16.mxu0 0
  %1647 = vmatpush1.bf16.msra.mxu0 0
  %1648 = vmatprep.subr.bf16.mxu0 0
  %1649 = vmatpush1.bf16.msra.mxu0 0
  %1650 = vmatprep.subr.bf16.mxu0 0
  %1651 = vmatpush1.bf16.msra.mxu0 0
  %1652 = vmatprep.subr.bf16.mxu0 0
  %1653 = vmatpush1.bf16.msra.mxu0 0
  %1654 = vmatprep.mubr.bf16.mxu0 0
  %1655 = vmatmul.mubr.bf16.gmra.mrb[0].mxu0 %v1608
  %v1656 = vpop.f32.mrb[0].mxu0
  %v1657 = vadd.f32 0.0, %v1656
  %v1658 = vpop.f32.mrb[0].mxu0
  %v1659 = vpop.f32.mrb[0].mxu0
  %v1660 = vadd.f32 0.0, %v1659
  %v1661 = vpop.f32.mrb[0].mxu0
  %1662 = vmatprep.mubr.bf16.mxu0 0
  %1663 = vmatmul.mubr.bf16.gmra.mrb[0].mxu0 %v1611
  %v1664 = vpop.f32.mrb[0].mxu0
  %v1665 = vadd.f32 0.0, %v1664
  %v1666 = vpop.f32.mrb[0].mxu0
  %v1667 = vpop.f32.mrb[0].mxu0
  %v1668 = vadd.f32 0.0, %v1667
  %v1669 = vpop.f32.mrb[0].mxu0
  %1670 = vmatprep.mubr.bf16.mxu0 0
  %1671 = vmatmul.mubr.bf16.gmra.mrb[0].mxu0 %v1614
  %v1672 = vpop.f32.mrb[0].mxu0
  %v1673 = vadd.f32 0.0, %v1672
  %v1674 = vpop.f32.mrb[0].mxu0
  %v1675 = vpop.f32.mrb[0].mxu0
  %v1676 = vadd.f32 0.0, %v1675
  %v1677 = vpop.f32.mrb[0].mxu0
  %1678 = vmatprep.mubr.bf16.mxu0 0
  %1679 = vmatmul.mubr.bf16.gmra.mrb[0].mxu0 %v1617
  %v1680 = vpop.f32.mrb[0].mxu0
  %v1681 = vadd.f32 0.0, %v1680
  %v1682 = vpop.f32.mrb[0].mxu0
  %v1683 = vpop.f32.mrb[0].mxu0
  %v1684 = vadd.f32 0.0, %v1683
  %v1685 = vpop.f32.mrb[0].mxu0
  %1686 = vmatprep.mubr.bf16.mxu0 0
  %1687 = vmatmul.mubr.bf16.gmra.mrb[0].mxu0 %v1620
  %v1688 = vpop.f32.mrb[0].mxu0
  %v1689 = vadd.f32 0.0, %v1688
  %v1690 = vpop.f32.mrb[0].mxu0
  %v1691 = vpop.f32.mrb[0].mxu0
  %v1692 = vpop.f32.mrb[0].mxu0
  %1693 = vdwg.mxu0
  %v1696 = vunpack.c.l.b16 %v1592
  %v1697 = vunpack.c.l.b16 %v1593
  %v1698 = vpack.c.b16 %v1697, %v1696
  %v1701 = vsel %vm224, %v1587, 0
  %v1704 = vsel %vm224, %v1588, 0
  %v1707 = vsel %vm224, %v1589, 0
  %v1710 = vsel %vm224, %v1590, 0
  %v1713 = vsel %vm224, %v1591, 0
  %1715 = vmatprep.subr.bf16.mxu0 0
  %1716 = vmatpush1.bf16.msra.mxu0 %v1698
  %1717 = vmatprep.subr.bf16.mxu0 0
  %1718 = vmatpush1.bf16.msra.mxu0 0
  %1719 = vmatprep.subr.bf16.mxu0 0
  %1720 = vmatpush1.bf16.msra.mxu0 0
  %1721 = vmatprep.subr.bf16.mxu0 0
  %1722 = vmatpush1.bf16.msra.mxu0 0
  %1723 = vmatprep.subr.bf16.mxu0 0
  %1724 = vmatpush1.bf16.msra.mxu0 0
  %1725 = vmatprep.subr.bf16.mxu0 0
  %1726 = vmatpush1.bf16.msra.mxu0 0
  %1727 = vmatprep.subr.bf16.mxu0 0
  %1728 = vmatpush1.bf16.msra.mxu0 0
  %1729 = vmatprep.subr.bf16.mxu0 0
  %1730 = vmatpush1.bf16.msra.mxu0 0
  %1731 = vmatprep.subr.bf16.mxu0 0
  %1732 = vmatpush1.bf16.msra.mxu0 0
  %1733 = vmatprep.subr.bf16.mxu0 0
  %1734 = vmatpush1.bf16.msra.mxu0 0
  %1735 = vmatprep.subr.bf16.mxu0 0
  %1736 = vmatpush1.bf16.msra.mxu0 0
  %1737 = vmatprep.subr.bf16.mxu0 0
  %1738 = vmatpush1.bf16.msra.mxu0 0
  %1739 = vmatprep.subr.bf16.mxu0 0
  %1740 = vmatpush1.bf16.msra.mxu0 0
  %1741 = vmatprep.subr.bf16.mxu0 0
  %1742 = vmatpush1.bf16.msra.mxu0 0
  %1743 = vmatprep.subr.bf16.mxu0 0
  %1744 = vmatpush1.bf16.msra.mxu0 0
  %1745 = vmatprep.subr.bf16.mxu0 0
  %1746 = vmatpush1.bf16.msra.mxu0 0
  %1747 = vmatprep.mubr.bf16.mxu0 0
  %1748 = vmatmul.mubr.bf16.gmra.mrb[0].mxu0 %v1701
  %v1749 = vpop.f32.mrb[0].mxu0
  %v1750 = vadd.f32 %v1657, %v1749
  %v1751 = vpop.f32.mrb[0].mxu0
  %v1752 = vpop.f32.mrb[0].mxu0
  %v1753 = vadd.f32 %v1660, %v1752
  %v1754 = vpop.f32.mrb[0].mxu0
  %1755 = vmatprep.mubr.bf16.mxu0 0
  %1756 = vmatmul.mubr.bf16.gmra.mrb[0].mxu0 %v1704
  %v1757 = vpop.f32.mrb[0].mxu0
  %v1758 = vadd.f32 %v1665, %v1757
  %v1759 = vpop.f32.mrb[0].mxu0
  %v1760 = vpop.f32.mrb[0].mxu0
  %v1761 = vadd.f32 %v1668, %v1760
  %v1762 = vpop.f32.mrb[0].mxu0
  %1763 = vmatprep.mubr.bf16.mxu0 0
  %1764 = vmatmul.mubr.bf16.gmra.mrb[0].mxu0 %v1707
  %v1765 = vpop.f32.mrb[0].mxu0
  %v1766 = vadd.f32 %v1673, %v1765
  %v1767 = vpop.f32.mrb[0].mxu0
  %v1768 = vpop.f32.mrb[0].mxu0
  %v1769 = vadd.f32 %v1676, %v1768
  %v1770 = vpop.f32.mrb[0].mxu0
  %1771 = vmatprep.mubr.bf16.mxu0 0
  %1772 = vmatmul.mubr.bf16.gmra.mrb[0].mxu0 %v1710
  %v1773 = vpop.f32.mrb[0].mxu0
  %v1774 = vadd.f32 %v1681, %v1773
  %v1775 = vpop.f32.mrb[0].mxu0
  %v1776 = vpop.f32.mrb[0].mxu0
  %v1777 = vadd.f32 %v1684, %v1776
  %v1778 = vpop.f32.mrb[0].mxu0
  %1779 = vmatprep.mubr.bf16.mxu0 0
  %1780 = vmatmul.mubr.bf16.gmra.mrb[0].mxu0 %v1713
  %v1781 = vpop.f32.mrb[0].mxu0
  %v1782 = vadd.f32 %v1689, %v1781
  %v1783 = vpop.f32.mrb[0].mxu0
  %v1784 = vpop.f32.mrb[0].mxu0
  %v1785 = vpop.f32.mrb[0].mxu0
  %1786 = vdwg.mxu0
  %v1787 = vld [vmem:[%s9] sm:$0x1]
  %v1789 = vlaneseq
  %v1790 = vshrl.u32 %v1789, 7
  %v1791 = vsub.s32 0, %v1790
  %v1792 = vrot.slane %v1787, %v1791
  %v1794 = vadd.f32 %v1750, %v1792
  %v1795 = vadd.f32 %v1753, %v1792
  %v1796 = vadd.f32 %v1758, %v1792
  %v1797 = vadd.f32 %v1761, %v1792
  %v1798 = vadd.f32 %v1766, %v1792
  %v1799 = vadd.f32 %v1769, %v1792
  %v1800 = vadd.f32 %v1774, %v1792
  %v1801 = vadd.f32 %v1777, %v1792
  %v1802 = vadd.f32 %v1782, %v1792
  %v1803 = vxor.u32 %v1794, 2147483648
  %v1804 = vxor.u32 %v1795, 2147483648
  %v1805 = vxor.u32 %v1796, 2147483648
  %v1806 = vxor.u32 %v1797, 2147483648
  %v1807 = vxor.u32 %v1798, 2147483648
  %v1808 = vxor.u32 %v1799, 2147483648
  %v1809 = vxor.u32 %v1800, 2147483648
  %v1810 = vxor.u32 %v1801, 2147483648
  %v1811 = vxor.u32 %v1802, 2147483648
  %v1812 = vmul.f32 %v1803, 1.442695
  %v1813 = vpow.pop %v1812
  %v1814 = vmul.f32 %v1804, 1.442695
  %v1815 = vpow.pop %v1814
  %v1816 = vmul.f32 %v1805, 1.442695
  %v1817 = vpow.pop %v1816
  %v1818 = vmul.f32 %v1806, 1.442695
  %v1819 = vpow.pop %v1818
  %v1820 = vmul.f32 %v1807, 1.442695
  %v1821 = vpow.pop %v1820
  %v1822 = vmul.f32 %v1808, 1.442695
  %v1823 = vpow.pop %v1822
  %v1824 = vmul.f32 %v1809, 1.442695
  %v1825 = vpow.pop %v1824
  %v1826 = vmul.f32 %v1810, 1.442695
  %v1827 = vpow.pop %v1826
  %v1828 = vmul.f32 %v1811, 1.442695
  %v1829 = vpow.pop %v1828
  %v1830 = vadd.f32 %v1813, 1.0
  %v1831 = vadd.f32 %v1815, 1.0
  %v1832 = vadd.f32 %v1817, 1.0
  %v1833 = vadd.f32 %v1819, 1.0
  %v1834 = vadd.f32 %v1821, 1.0
  %v1835 = vadd.f32 %v1823, 1.0
  %v1836 = vadd.f32 %v1825, 1.0
  %v1837 = vadd.f32 %v1827, 1.0
  %v1838 = vadd.f32 %v1829, 1.0
  %v1839 = vrcp.pop %v1830
  %v1840 = vmul.f32 1.0, %v1839
  %v1841 = vrcp.pop %v1831
  %v1842 = vmul.f32 1.0, %v1841
  %v1843 = vrcp.pop %v1832
  %v1844 = vmul.f32 1.0, %v1843
  %v1845 = vrcp.pop %v1833
  %v1846 = vmul.f32 1.0, %v1845
  %v1847 = vrcp.pop %v1834
  %v1848 = vmul.f32 1.0, %v1847
  %v1849 = vrcp.pop %v1835
  %v1850 = vmul.f32 1.0, %v1849
  %v1851 = vrcp.pop %v1836
  %v1852 = vmul.f32 1.0, %v1851
  %v1853 = vrcp.pop %v1837
  %v1854 = vmul.f32 1.0, %v1853
  %v1855 = vrcp.pop %v1838
  %v1856 = vmul.f32 1.0, %v1855
  %v1857 = vmul.f32 %v1794, %v1840
  %v1858 = vmul.f32 %v1795, %v1842
  %v1859 = vmul.f32 %v1796, %v1844
  %v1860 = vmul.f32 %v1797, %v1846
  %v1861 = vmul.f32 %v1798, %v1848
  %v1862 = vmul.f32 %v1799, %v1850
  %v1863 = vmul.f32 %v1800, %v1852
  %v1864 = vmul.f32 %v1801, %v1854
  %v1865 = vmul.f32 %v1802, %v1856
  %v1866 = vpack.c.bf16 %v1858, %v1857
  %v1867 = vpack.c.bf16 %v1860, %v1859
  %v1868 = vpack.c.bf16 %v1862, %v1861
  %v1869 = vpack.c.bf16 %v1864, %v1863
  %v1870 = vpack.c.bf16 %v1865, %v1865
  %v1871 = vld [vmem:[%s5] sm:$0xf]
  %v1872 = vld [vmem:[%s5 + $0x4] sm:$0xf]
  %v1873 = vld [vmem:[%s10] sm:$0x1]
  %v1875 = vlaneseq
  %v1876 = vshrl.u32 %v1875, 7
  %v1877 = vsub.s32 0, %v1876
  %v1878 = vrot.slane %v1873, %v1877
  %v1882 = vunpack.c.l.b16 %v1871
  %v1883 = vunpack.c.l.b16 %v1872
  %v1884 = vpack.c.b16 %v1883, %v1882
  %v1887 = vsel %vm224, %v1866, 0
  %v1890 = vsel %vm224, %v1867, 0
  %v1893 = vsel %vm224, %v1868, 0
  %v1896 = vsel %vm224, %v1869, 0
  %v1899 = vsel %vm224, %v1870, 0
  %1901 = vmatprep.subr.bf16.mxu0 0
  %1902 = vmatpush1.bf16.msra.mxu0 %v1884
  %1903 = vmatprep.subr.bf16.mxu0 0
  %1904 = vmatpush1.bf16.msra.mxu0 0
  %1905 = vmatprep.subr.bf16.mxu0 0
  %1906 = vmatpush1.bf16.msra.mxu0 0
  %1907 = vmatprep.subr.bf16.mxu0 0
  %1908 = vmatpush1.bf16.msra.mxu0 0
  %1909 = vmatprep.subr.bf16.mxu0 0
  %1910 = vmatpush1.bf16.msra.mxu0 0
  %1911 = vmatprep.subr.bf16.mxu0 0
  %1912 = vmatpush1.bf16.msra.mxu0 0
  %1913 = vmatprep.subr.bf16.mxu0 0
  %1914 = vmatpush1.bf16.msra.mxu0 0
  %1915 = vmatprep.subr.bf16.mxu0 0
  %1916 = vmatpush1.bf16.msra.mxu0 0
  %1917 = vmatprep.subr.bf16.mxu0 0
  %1918 = vmatpush1.bf16.msra.mxu0 0
  %1919 = vmatprep.subr.bf16.mxu0 0
  %1920 = vmatpush1.bf16.msra.mxu0 0
  %1921 = vmatprep.subr.bf16.mxu0 0
  %1922 = vmatpush1.bf16.msra.mxu0 0
  %1923 = vmatprep.subr.bf16.mxu0 0
  %1924 = vmatpush1.bf16.msra.mxu0 0
  %1925 = vmatprep.subr.bf16.mxu0 0
  %1926 = vmatpush1.bf16.msra.mxu0 0
  %1927 = vmatprep.subr.bf16.mxu0 0
  %1928 = vmatpush1.bf16.msra.mxu0 0
  %1929 = vmatprep.subr.bf16.mxu0 0
  %1930 = vmatpush1.bf16.msra.mxu0 0
  %1931 = vmatprep.subr.bf16.mxu0 0
  %1932 = vmatpush1.bf16.msra.mxu0 0
  %1933 = vmatprep.mubr.bf16.mxu0 0
  %1934 = vmatmul.mubr.bf16.gmra.mrb[0].mxu0 %v1887
  %v1935 = vpop.f32.mrb[0].mxu0
  %v1936 = vadd.f32 %v1878, %v1935
  %v1937 = vpop.f32.mrb[0].mxu0
  %v1938 = vpop.f32.mrb[0].mxu0
  %v1939 = vadd.f32 %v1878, %v1938
  %v1940 = vpop.f32.mrb[0].mxu0
  %1941 = vmatprep.mubr.bf16.mxu0 0
  %1942 = vmatmul.mubr.bf16.gmra.mrb[0].mxu0 %v1890
  %v1943 = vpop.f32.mrb[0].mxu0
  %v1944 = vadd.f32 %v1878, %v1943
  %v1945 = vpop.f32.mrb[0].mxu0
  %v1946 = vpop.f32.mrb[0].mxu0
  %v1947 = vadd.f32 %v1878, %v1946
  %v1948 = vpop.f32.mrb[0].mxu0
  %1949 = vmatprep.mubr.bf16.mxu0 0
  %1950 = vmatmul.mubr.bf16.gmra.mrb[0].mxu0 %v1893
  %v1951 = vpop.f32.mrb[0].mxu0
  %v1952 = vadd.f32 %v1878, %v1951
  %v1953 = vpop.f32.mrb[0].mxu0
  %v1954 = vpop.f32.mrb[0].mxu0
  %v1955 = vadd.f32 %v1878, %v1954
  %v1956 = vpop.f32.mrb[0].mxu0
  %1957 = vmatprep.mubr.bf16.mxu0 0
  %1958 = vmatmul.mubr.bf16.gmra.mrb[0].mxu0 %v1896
  %v1959 = vpop.f32.mrb[0].mxu0
  %v1960 = vadd.f32 %v1878, %v1959
  %v1961 = vpop.f32.mrb[0].mxu0
  %v1962 = vpop.f32.mrb[0].mxu0
  %v1963 = vadd.f32 %v1878, %v1962
  %v1964 = vpop.f32.mrb[0].mxu0
  %1965 = vmatprep.mubr.bf16.mxu0 0
  %1966 = vmatmul.mubr.bf16.gmra.mrb[0].mxu0 %v1899
  %v1967 = vpop.f32.mrb[0].mxu0
  %v1968 = vadd.f32 %v1878, %v1967
  %v1969 = vpop.f32.mrb[0].mxu0
  %v1970 = vpop.f32.mrb[0].mxu0
  %v1971 = vpop.f32.mrb[0].mxu0
  %1972 = vdwg.mxu0
  %1973 = vst [vmem:[%s12] sm:$0xff] %v1936
  %1974 = vst [vmem:[%s12 + $0x8] sm:$0xff] %v1939
  %1975 = vst [vmem:[%s12 + $0x10] sm:$0xff] %v1944
  %1976 = vst [vmem:[%s12 + $0x18] sm:$0xff] %v1947
  %1977 = vst [vmem:[%s12 + $0x20] sm:$0xff] %v1952
  %1978 = vst [vmem:[%s12 + $0x28] sm:$0xff] %v1955
  %1979 = vst [vmem:[%s12 + $0x30] sm:$0xff] %v1960
  %1980 = vst [vmem:[%s12 + $0x38] sm:$0xff] %v1963
  %1981 = vst [vmem:[%s12 + $0x40] sm:$0xff] %v1968
  // Predicated region
  $region50: #{_fused_forward.1} parent=0 // pred_check
    _
  $region51: #{_fused_forward.1} parent=0 // pred_check_branch
    %1983 = sbr.rel (0) target = $region53
  $region52: #{_fused_forward.1} parent=0 // pred_region
    _
  $region53: #{_fused_forward.1} parent=0 // pred_fallthru
    _
  // Predicated region
  $region54: #{_fused_forward.1} parent=0 // pred_check
    _
  $region55: #{_fused_forward.1} parent=0 // pred_check_branch
    %1985 = sbr.rel (0) target = $region57
  $region56: #{_fused_forward.1} parent=0 // pred_region
    _
  $region57: #{_fused_forward.1} parent=0 // pred_fallthru
    _

</llo_original>
